<compile_context>
chip_gen: v6e
topology: v6e:2x2x1
jax: 0.10.0
libtpu: 0.0.40
codegen_flags: <defaults>
</compile_context>

<pallas_src>
import functools

import numpy as np
import jax
import jax.numpy as jnp
from jax import lax
from jax.experimental import pallas as pl
from jax.experimental.pallas import tpu as pltpu


def _round_up(x, m):
  return (x + m - 1) // m * m


def _decoder_kernel(gi_ref, whh_f_ref, whh_b_ref, bhh_ref, w2x_ref, le_ref,
                    h0_ref, out_ref, *, Hp, Vp, n_words, sos_token,
                    teacher_forcing, w_dtype):
  H3 = 3 * Hp
  bhh = bhh_ref[...]                       # (1, 6*Hp) f32  [fwd 3Hp | bwd 3Hp]
  bhh_f, bhh_b = bhh[:, :H3], bhh[:, H3:]
  logit_enc = le_ref[...]                  # (1, Vp) f32  (pad cols = -1e30)
  h0 = h0_ref[...]                         # (1, Hp) f32

  if not teacher_forcing:
    lane = lax.broadcasted_iota(jnp.int32, (1, Vp), 1)
    sos_mask = lane == sos_token           # loop-invariant

  # Row 0 is sliced off by the wrapper; zero it once for determinism.
  out_ref[pl.ds(0, 1), :] = jnp.zeros((1, Vp), jnp.float32)

  def hidden_gates(h_f, h_b):
    # Two dense (1,Hp)@(Hp,3Hp) dots; bf16 weight stream, f32 accumulation.
    gh_f = jnp.dot(h_f.astype(w_dtype), whh_f_ref[...],
                   preferred_element_type=jnp.float32) + bhh_f
    gh_b = jnp.dot(h_b.astype(w_dtype), whh_b_ref[...],
                   preferred_element_type=jnp.float32) + bhh_b
    return gh_f, gh_b

  gh_f0, gh_b0 = hidden_gates(h0, h0)

  def cell(gi_d, gh_d, h_d):
    r = jax.nn.sigmoid(gi_d[:, :Hp] + gh_d[:, :Hp])
    zg = jax.nn.sigmoid(gi_d[:, Hp:2 * Hp] + gh_d[:, Hp:2 * Hp])
    # PyTorch GRU: hidden bias of n stays inside r * (.)  (bhh already in gh).
    n = jnp.tanh(gi_d[:, 2 * Hp:] + r * gh_d[:, 2 * Hp:])
    return (1.0 - zg) * n + zg * h_d

  def body(i, carry):
    word, h_f, h_b, gh_f, gh_b = carry

    # Input-gate term: one dynamic row read (embed + enc + bih pre-folded).
    if teacher_forcing:
      gi = gi_ref[pl.ds(i, 1), :]          # pre-gathered, step-indexed row
    else:
      gi = gi_ref[pl.ds(word, 1), :]       # token-indexed row

    h_f_new = cell(gi[:, :H3], gh_f, h_f)
    h_b_new = cell(gi[:, H3:], gh_b, h_b)

    # Software pipeline: next step's hidden-gate matmuls issued here so the
    # scheduler can overlap them with the logits matmul / argmax below.
    gh_f_next, gh_b_next = hidden_gates(h_f_new, h_b_new)

    # bidirectional output: out[:, H:] + out[:, :H]  ==  backward + forward
    o = h_f_new + h_b_new                                            # (1, Hp)
    logits = jnp.dot(o.astype(w_dtype), w2x_ref[...],
                     preferred_element_type=jnp.float32) + logit_enc  # (1, Vp)
    out_ref[pl.ds(i, 1), :] = logits

    if teacher_forcing:
      next_word = word                     # unused; keeps carry structure
    else:
      # "top1 unless it is SOS, then top2"  ==  argmax with SOS lane masked.
      sel = jnp.where(sos_mask, -jnp.inf, logits)
      m = jnp.max(sel, axis=1, keepdims=True)
      next_word = jnp.min(jnp.where(sel == m, lane, Vp),
                          axis=1)[0].astype(jnp.int32)

    return next_word, h_f_new, h_b_new, gh_f_next, gh_b_next

  lax.fori_loop(1, n_words, body,
                (jnp.int32(sos_token), h0, h0, gh_f0, gh_b0))


def _pack_decoder(params, z, context, weights_dtype):
  """Wrapper-side weight packing / padding / loop-invariant precompute.

  Layout of all 6*Hp-wide gate tensors: [fwd r|z|n | bwd r|z|n], each Hp wide.
  """
  H = params['w1'].shape[1]
  V = params['w2'].shape[1]
  zc = params['w1'].shape[0]
  Hp = _round_up(H, 128)
  Vp = _round_up(V, 128)
  Vr = _round_up(V, 8)

  enc = jnp.concatenate([z, context], axis=1).astype(jnp.float32)    # (1, zc)

  def gates(w):                      # (rows, 3H) -> r, z, n each (rows, H)
    return w[:, :H], w[:, H:2 * H], w[:, 2 * H:]

  def pad_cols(g, rows_p):           # (rows, H) -> (rows_p, Hp)
    rows = g.shape[0]
    return jnp.zeros((rows_p, Hp), jnp.float32).at[:rows, :H].set(g)

  def dir3(w, rows_p):               # (rows, 3H) -> (rows_p, 3Hp)  [r|z|n]
    return jnp.concatenate([pad_cols(g, rows_p) for g in gates(w)], axis=1)

  # Split input-gate weights into embedding rows (_x) and encoded_r rows (_e).
  wfx, wfe = params['wih_f'][:H], params['wih_f'][H:]
  wbx, wbe = params['wih_b'][:H], params['wih_b'][H:]
  Wx = jnp.concatenate([dir3(wfx, Hp), dir3(wbx, Hp)], axis=1)       # (Hp, 6Hp)
  We = jnp.concatenate([dir3(wfe, zc), dir3(wbe, zc)], axis=1)       # (zc, 6Hp)
  bih = jnp.concatenate([dir3(params['bih_f'], 1),
                         dir3(params['bih_b'], 1)], axis=1)          # (1, 6Hp)

  # Per-token input-gate table: giE[v] = embed[v]@Wx + enc@We + bih (invariant).
  embed_p = jnp.zeros((Vr, Hp), jnp.float32).at[:V, :H].set(params['embed'])
  giE = embed_p @ Wx + (enc @ We + bih)                              # (Vr, 6Hp)

  whh_f = dir3(params['whh_f'], Hp).astype(weights_dtype)            # (Hp, 3Hp)
  whh_b = dir3(params['whh_b'], Hp).astype(weights_dtype)
  bhh = jnp.concatenate([dir3(params['bhh_f'], 1),
                         dir3(params['bhh_b'], 1)], axis=1)          # (1, 6Hp)

  # fc2: hidden-output rows stay in the kernel; encoded_r rows + bias folded.
  w2x = jnp.zeros((Hp, Vp), jnp.float32).at[:H, :V].set(
      params['w2'][:H]).astype(weights_dtype)                        # (Hp, Vp)
  logit_enc = jnp.full((1, Vp), -1e30, jnp.float32).at[:, :V].set(
      enc @ params['w2'][H:] + params['b2'])

  # h0 = fc1(encoded_r); both GRU directions start from the same h0.
  h0 = jnp.zeros((1, Hp), jnp.float32).at[:, :H].set(
      enc @ params['w1'] + params['b1'])

  return dict(giE=giE, whh_f=whh_f, whh_b=whh_b, bhh=bhh, w2x=w2x,
              logit_enc=logit_enc, h0=h0, H=H, V=V, Hp=Hp, Vp=Vp)


def decoder_forward(params, z, context, n_words, response=None, *,
                    sos_token, weights_dtype=jnp.bfloat16):
  V = params['w2'].shape[1]
  assert 0 <= sos_token < V
  pk = _pack_decoder(params, z, context, weights_dtype)
  Hp, Vp = pk['Hp'], pk['Vp']
  teacher_forcing = response is not None

  if teacher_forcing:
    # truthrate == 1: input token at step i is SOS (i == 1) else response[i-1].
    # Pre-gather the gi rows so the (Vr, 6Hp) table never enters VMEM.
    resp = jnp.asarray(response, jnp.int32).reshape(n_words)
    in_tok = jnp.concatenate(
        [jnp.full((2,), sos_token, jnp.int32), resp[1:n_words - 1]])
    gi_table = jnp.take(pk['giE'], in_tok, axis=0)        # (n_words, 6Hp)
  else:
    gi_table = pk['giE']                                  # (Vr, 6Hp)

  kernel = functools.partial(
      _decoder_kernel, Hp=Hp, Vp=Vp, n_words=n_words, sos_token=sos_token,
      teacher_forcing=teacher_forcing, w_dtype=weights_dtype)

  vmem = pl.BlockSpec(memory_space=pltpu.MemorySpace.VMEM)
  args = (gi_table, pk['whh_f'], pk['whh_b'], pk['bhh'], pk['w2x'],
          pk['logit_enc'], pk['h0'])

  # Scoped-VMEM sizing: resident footprint + headroom, clamped to the chip's
  # physical VMEM (v7x: 64 MiB / core — the old 120 MiB clamp was invalid).
  resident = sum(int(a.size) * a.dtype.itemsize for a in args)
  resident += n_words * Vp * 4
  try:
    phys = int(pltpu.get_tpu_info().vmem_capacity_bytes)
  except Exception:
    phys = 64 << 20
  vmem_limit = int(min(max(resident + (16 << 20), 32 << 20), phys - (2 << 20)))

  out = pl.pallas_call(
      kernel,
      out_shape=jax.ShapeDtypeStruct((n_words, Vp), jnp.float32),
      in_specs=[vmem] * len(args),
      out_specs=vmem,
      compiler_params=pltpu.CompilerParams(vmem_limit_bytes=vmem_limit),
  )(*args)

  # decoded_r.squeeze(1)[1:, :output_size - 1]  (also drops the V padding)
  return out[1:, :V - 1]


def init_params(key, z_size, context_size, hidden_size, output_size):
  H, V = hidden_size, output_size
  zc = z_size + context_size
  gin = H + zc
  ks = jax.random.split(key, 16)

  def u(k, shape, fan_in):
    s = 1.0 / np.sqrt(fan_in)
    return jax.random.uniform(k, shape, jnp.float32, -s, s)

  return dict(
      embed=jax.random.normal(ks[0], (V, H), jnp.float32) * 0.1,
      w1=u(ks[1], (zc, H), zc), b1=u(ks[2], (1, H), zc),
      wih_f=u(ks[3], (gin, 3 * H), H), whh_f=u(ks[4], (H, 3 * H), H),
      bih_f=u(ks[5], (1, 3 * H), H), bhh_f=u(ks[6], (1, 3 * H), H),
      wih_b=u(ks[7], (gin, 3 * H), H), whh_b=u(ks[8], (H, 3 * H), H),
      bih_b=u(ks[9], (1, 3 * H), H), bhh_b=u(ks[10], (1, 3 * H), H),
      w2=u(ks[11], (gin, V), gin), b2=u(ks[12], (1, V), gin),
  )


def decoder_reference(params, z, context, n_words, response=None, *, sos_token):
  """Pure JAX/NumPy reference mirroring the PyTorch forward (f32)."""
  H = params['w1'].shape[1]
  V = params['w2'].shape[1]
  enc = jnp.concatenate([z, context], axis=1).astype(jnp.float32)
  h = enc @ params['w1'] + params['b1']
  h_fw, h_bw = h, h

  decoded = np.zeros((n_words, V), np.float32)
  word = int(sos_token)
  for i in range(1, n_words):
    emb = params['embed'][word][None, :]
    x = jnp.concatenate([emb, enc], axis=1)

    def cell(h, wih, whh, bih, bhh):
      gi = x @ wih + bih
      gh = h @ whh + bhh
      r = jax.nn.sigmoid(gi[:, :H] + gh[:, :H])
      zg = jax.nn.sigmoid(gi[:, H:2 * H] + gh[:, H:2 * H])
      n = jnp.tanh(gi[:, 2 * H:] + r * gh[:, 2 * H:])
      return (1.0 - zg) * n + zg * h

    h_fw = cell(h_fw, params['wih_f'], params['whh_f'], params['bih_f'], params['bhh_f'])
    h_bw = cell(h_bw, params['wih_b'], params['whh_b'], params['bih_b'], params['bhh_b'])
    o = h_fw + h_bw
    logits = jnp.concatenate([o, enc], axis=1) @ params['w2'] + params['b2']
    row = np.asarray(logits[0])
    decoded[i] = row

    if response is not None:
      word = int(np.asarray(response)[i])
    else:
      idx1 = int(np.argmax(row))
      masked = row.copy()
      masked[idx1] = -np.inf
      idx2 = int(np.argmax(masked))
      word = idx1 if idx1 != sos_token else idx2
  return decoded[1:, :V - 1]


def decoder_reference_packed(pk, n_words, response, sos_token):
  """Reference on the SAME packed/quantized tables the kernel consumes
  (validates the bf16 fast path step-for-step, incl. greedy selection)."""
  Hp, Vp, V = pk['Hp'], pk['Vp'], pk['V']
  H3 = 3 * Hp
  wdt = pk['whh_f'].dtype
  giE = np.asarray(pk['giE'])
  bhh = np.asarray(pk['bhh'])
  bhh_f, bhh_b = bhh[:, :H3], bhh[:, H3:]
  logit_enc = np.asarray(pk['logit_enc'])

  def dot_w(a, w):
    return np.asarray(jnp.dot(jnp.asarray(a, jnp.float32).astype(wdt), w,
                              preferred_element_type=jnp.float32))

  def sig(x):
    return 1.0 / (1.0 + np.exp(-x))

  def cell(gi_d, gh_d, h_d):
    r = sig(gi_d[:, :Hp] + gh_d[:, :Hp])
    zg = sig(gi_d[:, Hp:2 * Hp] + gh_d[:, Hp:2 * Hp])
    n = np.tanh(gi_d[:, 2 * Hp:] + r * gh_d[:, 2 * Hp:])
    return (1.0 - zg) * n + zg * h_d

  h_f = np.asarray(pk['h0'])
  h_b = np.asarray(pk['h0'])
  gh_f = dot_w(h_f, pk['whh_f']) + bhh_f
  gh_b = dot_w(h_b, pk['whh_b']) + bhh_b
  out = np.zeros((n_words, Vp), np.float32)
  word = int(sos_token)
  for i in range(1, n_words):
    gi = giE[word][None, :]
    h_f = cell(gi[:, :H3], gh_f, h_f)
    h_b = cell(gi[:, H3:], gh_b, h_b)
    gh_f = dot_w(h_f, pk['whh_f']) + bhh_f
    gh_b = dot_w(h_b, pk['whh_b']) + bhh_b
    o = h_f + h_b
    logits = dot_w(o, pk['w2x']) + logit_enc
    out[i] = logits[0]
    if response is not None:
      word = int(np.asarray(response)[i])
    else:
      row = logits[0].copy()
      row[int(sos_token)] = -np.inf
      word = int(np.argmax(row))
  return out[1:, :V - 1]


if __name__ == "__main__":
  Z, C, H, V, T = 8, 8, 32, 32, 8
  SOS = V - 1                       # stand-in for SOS_token=5000 at small scale

  key = jax.random.PRNGKey(0)
  kp, kz, kc, kr = jax.random.split(key, 4)
  params = init_params(kp, Z, C, H, V)
  z = jax.random.normal(kz, (1, Z), jnp.float32)
  context = jax.random.normal(kc, (1, C), jnp.float32)
  response = jax.random.randint(kr, (T,), 0, V - 1)

  # --- Semantic validation (f32 weights) vs. the PyTorch-mirror reference ---
  out_free32 = jax.block_until_ready(decoder_forward(
      params, z, context, T, None, sos_token=SOS, weights_dtype=jnp.float32))
  ref_free = decoder_reference(params, z, context, T, None, sos_token=SOS)
  np.testing.assert_allclose(np.asarray(out_free32), ref_free, rtol=1e-4, atol=1e-4)

  out_tf32 = jax.block_until_ready(decoder_forward(
      params, z, context, T, response, sos_token=SOS, weights_dtype=jnp.float32))
  ref_tf = decoder_reference(params, z, context, T, response, sos_token=SOS)
  np.testing.assert_allclose(np.asarray(out_tf32), ref_tf, rtol=1e-4, atol=1e-4)

  # --- Fast path (bf16 matmul weights) vs. the packed-table reference -------
  pk = _pack_decoder(params, z, context, jnp.bfloat16)

  out_free = jax.block_until_ready(decoder_forward(
      params, z, context, T, None, sos_token=SOS))
  ref_free_bf = decoder_reference_packed(pk, T, None, SOS)
  np.testing.assert_allclose(np.asarray(out_free), ref_free_bf, rtol=5e-3, atol=5e-3)

  out_tf = jax.block_until_ready(decoder_forward(
      params, z, context, T, response, sos_token=SOS))
  ref_tf_bf = decoder_reference_packed(pk, T, response, SOS)
  np.testing.assert_allclose(np.asarray(out_tf), ref_tf_bf, rtol=5e-3, atol=5e-3)

  assert out_free.shape == (T - 1, V - 1)
  assert out_tf.shape == (T - 1, V - 1)
  print("KERNEL_OK")
</pallas_src>

<mosaic_0001>
module attributes {stable_mosaic.version = 11 : i64} {
  func.func @_decoder_kernel(%arg0: memref<32x768xf32, #tpu.memory_space<vmem>>, %arg1: memref<128x384xf32, #tpu.memory_space<vmem>>, %arg2: memref<128x384xf32, #tpu.memory_space<vmem>>, %arg3: memref<1x768xf32, #tpu.memory_space<vmem>>, %arg4: memref<128x128xf32, #tpu.memory_space<vmem>>, %arg5: memref<1x128xf32, #tpu.memory_space<vmem>>, %arg6: memref<1x128xf32, #tpu.memory_space<vmem>>, %arg7: memref<8x128xf32, #tpu.memory_space<vmem>>) attributes {dimension_semantics = [], scalar_prefetch = 0 : i64, scratch_operands = 0 : i64, tpu.core_type = #tpu.core_type<tc>} {
    %c0 = arith.constant 0 : index
    %c0_0 = arith.constant 0 : index
    %0 = vector.load %arg3[%c0, %c0_0] : memref<1x768xf32, #tpu.memory_space<vmem>>, vector<1x768xf32>
    %1 = vector.extract_strided_slice %0 {offsets = [0, 0], sizes = [1, 384], strides = [1, 1]} : vector<1x768xf32> to vector<1x384xf32>
    %2 = vector.extract_strided_slice %0 {offsets = [0, 384], sizes = [1, 384], strides = [1, 1]} : vector<1x768xf32> to vector<1x384xf32>
    %c0_1 = arith.constant 0 : index
    %c0_2 = arith.constant 0 : index
    %3 = vector.load %arg5[%c0_1, %c0_2] : memref<1x128xf32, #tpu.memory_space<vmem>>, vector<1x128xf32>
    %c0_3 = arith.constant 0 : index
    %c0_4 = arith.constant 0 : index
    %4 = vector.load %arg6[%c0_3, %c0_4] : memref<1x128xf32, #tpu.memory_space<vmem>>, vector<1x128xf32>
    %5 = tpu.iota {dimensions = array<i32: 1>} : vector<1x128xi32>
    %c31_i32 = arith.constant 31 : i32
    %6 = vector.broadcast %c31_i32 : i32 to vector<1x128xi32>
    %7 = arith.cmpi eq, %5, %6 : vector<1x128xi32>
    %cst = arith.constant 0.000000e+00 : f32
    %8 = vector.broadcast %cst : f32 to vector<1x128xf32>
    %c0_5 = arith.constant 0 : index
    %c0_6 = arith.constant 0 : index
    %9 = vector.load %arg7[%c0_5, %c0_6] : memref<8x128xf32, #tpu.memory_space<vmem>>, vector<1x128xf32>
    tpu.vector_store %arg7[%c0_5, %c0_6], %8 {strides = array<i32>} : memref<8x128xf32, #tpu.memory_space<vmem>>, vector<1x128xf32>,
    %c0_7 = arith.constant 0 : index
    %c0_8 = arith.constant 0 : index
    %10 = vector.load %arg1[%c0_7, %c0_8] : memref<128x384xf32, #tpu.memory_space<vmem>>, vector<128x384xf32>
    %cst_9 = arith.constant dense<0.000000e+00> : vector<1x384xf32>
    %11 = tpu.matmul %4, %10, %cst_9 {dimension_numbers = #tpu.dot_dimension_numbers<[1], [0], [0], [1], [0, 0, 1, 1], [], []>} : vector<1x128xf32>, vector<128x384xf32>, vector<1x384xf32> -> vector<1x384xf32>
    %12 = arith.addf %11, %1 : vector<1x384xf32>
    %c0_10 = arith.constant 0 : index
    %c0_11 = arith.constant 0 : index
    %13 = vector.load %arg2[%c0_10, %c0_11] : memref<128x384xf32, #tpu.memory_space<vmem>>, vector<128x384xf32>
    %cst_12 = arith.constant dense<0.000000e+00> : vector<1x384xf32>
    %14 = tpu.matmul %4, %13, %cst_12 {dimension_numbers = #tpu.dot_dimension_numbers<[1], [0], [0], [1], [0, 0, 1, 1], [], []>} : vector<1x128xf32>, vector<128x384xf32>, vector<1x384xf32> -> vector<1x384xf32>
    %15 = arith.addf %14, %2 : vector<1x384xf32>
    %c31_i32_13 = arith.constant 31 : i32
    %c1_i32 = arith.constant 1 : i32
    %c7_i32 = arith.constant 7 : i32
    %16 = arith.addi %c1_i32, %c7_i32 : i32
    %c1_i32_14 = arith.constant 1 : i32
    %17:5 = scf.for %arg8 = %c1_i32 to %16 step %c1_i32_14 iter_args(%arg9 = %c31_i32_13, %arg10 = %4, %arg11 = %4, %arg12 = %12, %arg13 = %15) -> (i32, vector<1x128xf32>, vector<1x128xf32>, vector<1x384xf32>, vector<1x384xf32>)  : i32 {
      %18 = arith.index_cast %arg9 : i32 to index
      %c0_16 = arith.constant 0 : index
      %19 = vector.load %arg0[%18, %c0_16] : memref<32x768xf32, #tpu.memory_space<vmem>>, vector<1x768xf32>
      %20 = vector.extract_strided_slice %19 {offsets = [0, 0], sizes = [1, 384], strides = [1, 1]} : vector<1x768xf32> to vector<1x384xf32>
      %21 = vector.extract_strided_slice %20 {offsets = [0, 0], sizes = [1, 128], strides = [1, 1]} : vector<1x384xf32> to vector<1x128xf32>
      %22 = vector.extract_strided_slice %arg12 {offsets = [0, 0], sizes = [1, 128], strides = [1, 1]} : vector<1x384xf32> to vector<1x128xf32>
      %23 = arith.addf %21, %22 : vector<1x128xf32>
      %24 = arith.negf %23 : vector<1x128xf32>
      %25 = math.exp %24 : vector<1x128xf32>
      %cst_17 = arith.constant 1.000000e+00 : f32
      %26 = vector.broadcast %cst_17 : f32 to vector<1x128xf32>
      %27 = arith.addf %26, %25 : vector<1x128xf32>
      %28 = arith.divf %26, %27 : vector<1x128xf32>
      %29 = vector.extract_strided_slice %20 {offsets = [0, 128], sizes = [1, 128], strides = [1, 1]} : vector<1x384xf32> to vector<1x128xf32>
      %30 = vector.extract_strided_slice %arg12 {offsets = [0, 128], sizes = [1, 128], strides = [1, 1]} : vector<1x384xf32> to vector<1x128xf32>
      %31 = arith.addf %29, %30 : vector<1x128xf32>
      %32 = arith.negf %31 : vector<1x128xf32>
      %33 = math.exp %32 : vector<1x128xf32>
      %cst_18 = arith.constant 1.000000e+00 : f32
      %34 = vector.broadcast %cst_18 : f32 to vector<1x128xf32>
      %35 = arith.addf %34, %33 : vector<1x128xf32>
      %36 = arith.divf %34, %35 : vector<1x128xf32>
      %37 = vector.extract_strided_slice %20 {offsets = [0, 256], sizes = [1, 128], strides = [1, 1]} : vector<1x384xf32> to vector<1x128xf32>
      %38 = vector.extract_strided_slice %arg12 {offsets = [0, 256], sizes = [1, 128], strides = [1, 1]} : vector<1x384xf32> to vector<1x128xf32>
      %39 = arith.mulf %28, %38 : vector<1x128xf32>
      %40 = arith.addf %37, %39 : vector<1x128xf32>
      %41 = math.tanh %40 : vector<1x128xf32>
      %cst_19 = arith.constant 1.000000e+00 : f32
      %42 = vector.broadcast %cst_19 : f32 to vector<1x128xf32>
      %43 = arith.subf %42, %36 : vector<1x128xf32>
      %44 = arith.mulf %43, %41 : vector<1x128xf32>
      %45 = arith.mulf %36, %arg10 : vector<1x128xf32>
      %46 = arith.addf %44, %45 : vector<1x128xf32>
      %47 = vector.extract_strided_slice %19 {offsets = [0, 384], sizes = [1, 384], strides = [1, 1]} : vector<1x768xf32> to vector<1x384xf32>
      %48 = vector.extract_strided_slice %47 {offsets = [0, 0], sizes = [1, 128], strides = [1, 1]} : vector<1x384xf32> to vector<1x128xf32>
      %49 = vector.extract_strided_slice %arg13 {offsets = [0, 0], sizes = [1, 128], strides = [1, 1]} : vector<1x384xf32> to vector<1x128xf32>
      %50 = arith.addf %48, %49 : vector<1x128xf32>
      %51 = arith.negf %50 : vector<1x128xf32>
      %52 = math.exp %51 : vector<1x128xf32>
      %cst_20 = arith.constant 1.000000e+00 : f32
      %53 = vector.broadcast %cst_20 : f32 to vector<1x128xf32>
      %54 = arith.addf %53, %52 : vector<1x128xf32>
      %55 = arith.divf %53, %54 : vector<1x128xf32>
      %56 = vector.extract_strided_slice %47 {offsets = [0, 128], sizes = [1, 128], strides = [1, 1]} : vector<1x384xf32> to vector<1x128xf32>
      %57 = vector.extract_strided_slice %arg13 {offsets = [0, 128], sizes = [1, 128], strides = [1, 1]} : vector<1x384xf32> to vector<1x128xf32>
      %58 = arith.addf %56, %57 : vector<1x128xf32>
      %59 = arith.negf %58 : vector<1x128xf32>
      %60 = math.exp %59 : vector<1x128xf32>
      %cst_21 = arith.constant 1.000000e+00 : f32
      %61 = vector.broadcast %cst_21 : f32 to vector<1x128xf32>
      %62 = arith.addf %61, %60 : vector<1x128xf32>
      %63 = arith.divf %61, %62 : vector<1x128xf32>
      %64 = vector.extract_strided_slice %47 {offsets = [0, 256], sizes = [1, 128], strides = [1, 1]} : vector<1x384xf32> to vector<1x128xf32>
      %65 = vector.extract_strided_slice %arg13 {offsets = [0, 256], sizes = [1, 128], strides = [1, 1]} : vector<1x384xf32> to vector<1x128xf32>
      %66 = arith.mulf %55, %65 : vector<1x128xf32>
      %67 = arith.addf %64, %66 : vector<1x128xf32>
      %68 = math.tanh %67 : vector<1x128xf32>
      %cst_22 = arith.constant 1.000000e+00 : f32
      %69 = vector.broadcast %cst_22 : f32 to vector<1x128xf32>
      %70 = arith.subf %69, %63 : vector<1x128xf32>
      %71 = arith.mulf %70, %68 : vector<1x128xf32>
      %72 = arith.mulf %63, %arg11 : vector<1x128xf32>
      %73 = arith.addf %71, %72 : vector<1x128xf32>
      %c0_23 = arith.constant 0 : index
      %c0_24 = arith.constant 0 : index
      %74 = vector.load %arg1[%c0_23, %c0_24] : memref<128x384xf32, #tpu.memory_space<vmem>>, vector<128x384xf32>
      %cst_25 = arith.constant dense<0.000000e+00> : vector<1x384xf32>
      %75 = tpu.matmul %46, %74, %cst_25 {dimension_numbers = #tpu.dot_dimension_numbers<[1], [0], [0], [1], [0, 0, 1, 1], [], []>} : vector<1x128xf32>, vector<128x384xf32>, vector<1x384xf32> -> vector<1x384xf32>
      %76 = arith.addf %75, %1 : vector<1x384xf32>
      %c0_26 = arith.constant 0 : index
      %c0_27 = arith.constant 0 : index
      %77 = vector.load %arg2[%c0_26, %c0_27] : memref<128x384xf32, #tpu.memory_space<vmem>>, vector<128x384xf32>
      %cst_28 = arith.constant dense<0.000000e+00> : vector<1x384xf32>
      %78 = tpu.matmul %73, %77, %cst_28 {dimension_numbers = #tpu.dot_dimension_numbers<[1], [0], [0], [1], [0, 0, 1, 1], [], []>} : vector<1x128xf32>, vector<128x384xf32>, vector<1x384xf32> -> vector<1x384xf32>
      %79 = arith.addf %78, %2 : vector<1x384xf32>
      %80 = arith.addf %46, %73 : vector<1x128xf32>
      %c0_29 = arith.constant 0 : index
      %c0_30 = arith.constant 0 : index
      %81 = vector.load %arg4[%c0_29, %c0_30] : memref<128x128xf32, #tpu.memory_space<vmem>>, vector<128x128xf32>
      %cst_31 = arith.constant dense<0.000000e+00> : vector<1x128xf32>
      %82 = tpu.matmul %80, %81, %cst_31 {dimension_numbers = #tpu.dot_dimension_numbers<[1], [0], [0], [1], [0, 0, 1, 1], [], []>} : vector<1x128xf32>, vector<128x128xf32>, vector<1x128xf32> -> vector<1x128xf32>
      %83 = arith.addf %82, %3 : vector<1x128xf32>
      %84 = arith.index_cast %arg8 : i32 to index
      %c0_32 = arith.constant 0 : index
      %85 = vector.load %arg7[%84, %c0_32] : memref<8x128xf32, #tpu.memory_space<vmem>>, vector<1x128xf32>
      tpu.vector_store %arg7[%84, %c0_32], %83 {strides = array<i32>} : memref<8x128xf32, #tpu.memory_space<vmem>>, vector<1x128xf32>,
      %cst_33 = arith.constant 0xFF800000 : f32
      %86 = vector.broadcast %cst_33 : f32 to vector<1x128xf32>
      %87 = arith.select %7, %86, %83 : vector<1x128xi1>, vector<1x128xf32>
      %cst_34 = arith.constant dense<0xFF800000> : vector<1xf32>
      %88 = vector.multi_reduction <maximumf>, %87, %cst_34 [1] : vector<1x128xf32> to vector<1xf32>
      %89 = vector.shape_cast %88 : vector<1xf32> to vector<1x1xf32>
      %90 = vector.broadcast %89 : vector<1x1xf32> to vector<1x128xf32>
      %91 = arith.cmpf oeq, %87, %90 : vector<1x128xf32>
      %c128_i32 = arith.constant 128 : i32
      %92 = vector.broadcast %c128_i32 : i32 to vector<1x128xi32>
      %93 = arith.select %91, %5, %92 : vector<1x128xi1>, vector<1x128xi32>
      %cst_35 = arith.constant dense<2147483647> : vector<1xi32>
      %94 = vector.multi_reduction <minsi>, %93, %cst_35 [1] : vector<1x128xi32> to vector<1xi32>
      %95 = vector.extract %94[0] : i32 from vector<1xi32>
      scf.yield %95, %46, %73, %76, %79 : i32, vector<1x128xf32>, vector<1x128xf32>, vector<1x384xf32>, vector<1x384xf32>
    }
    %c7_i32_15 = arith.constant 7 : i32
    return
  }
}

</mosaic_0001>

<llo_original>
// kernel: tpu_custom_call.1
$region0: #{tpu_custom_call.1}
  #allocation0 [shape = 'u32[]', space=smem, size = 0x4, offset = 0x4, fixed_abs, tag = 'smem constant byte address 0x4 - core index']
  #allocation1 [shape = 'u32[144,128]{1,0:T(1,128)}', space=vmem, size = 0x12000, scoped, tag = 'internal scratch']
  %s0 = inlined_call_operand.hbm [shape: f32[32,768], index: 0, kind: input, shape index: {}]
  %s1 = inlined_call_operand.hbm [shape: f32[128,384], index: 1, kind: input, shape index: {}]
  %s2 = inlined_call_operand.hbm [shape: f32[128,384], index: 2, kind: input, shape index: {}]
  %s3 = inlined_call_operand.hbm [shape: f32[1,768], index: 3, kind: input, shape index: {}]
  %s4 = inlined_call_operand.hbm [shape: f32[128,128], index: 4, kind: input, shape index: {}]
  %s5 = inlined_call_operand.vmem [shape: f32[1,128], index: 5, kind: input, shape index: {}]
  %s6 = inlined_call_operand.vmem [shape: f32[1,128], index: 6, kind: input, shape index: {}]
  %s7 = inlined_call_operand.hbm [shape: f32[8,128], index: 7, kind: output, shape index: {}]
  %s8 = sld [smem:[#allocation0]]
  $region65: #{tpu_custom_call.1} parent=0
    _
  %s10 = ssub.s32 1, %s8
  %s11 = scalar_select 0, %s10, %s8
  $region1: #{tpu_custom_call.1} parent=0
    #allocation2 [shape = 'u8[98304]{0}', space=vmem, size = 0x18000, scoped, tag = 'input window, operand 0, single buffered']
    #allocation3 [shape = 's32[1]{0}', space=sflag, size = 0x4, scoped, tag = 'scoped memory for tpu_custom_call.1']
    #allocation4 [shape = 's32[1]{0}', space=sflag, size = 0x4, scoped, tag = 'scoped memory for tpu_custom_call.1']
    #allocation5 [shape = 'u8[196608]{0}', space=vmem, size = 0x30000, scoped, tag = 'input window, operand 1, single buffered']
    #allocation6 [shape = 's32[1]{0}', space=sflag, size = 0x4, scoped, tag = 'scoped memory for tpu_custom_call.1']
    #allocation7 [shape = 'u8[196608]{0}', space=vmem, size = 0x30000, scoped, tag = 'input window, operand 2, single buffered']
    #allocation8 [shape = 'u8[3072]{0}', space=vmem, size = 0xc00, scoped, tag = 'input window, operand 3, single buffered']
    #allocation9 [shape = 's32[1]{0}', space=sflag, size = 0x4, scoped, tag = 'scoped memory for tpu_custom_call.1']
    #allocation10 [shape = 'u8[65536]{0}', space=vmem, size = 0x10000, scoped, tag = 'input window, operand 4, single buffered']
    #allocation11 [shape = 'u8[4096]{0}', space=vmem, size = 0x1000, scoped, tag = 'output window, operand 0, single buffered']
    %12 = vsyncpa [#allocation3], 0
    %13 = vsyncpa [#allocation6], 0
    %14 = vsyncpa [#allocation9], 0
    %15 = vsyncpa [#allocation4], 0
    // Predicated region
    $region2: #{tpu_custom_call.1} parent=1 // pred_check
      _
    $region3: #{tpu_custom_call.1} parent=1 // pred_check_branch
      %17 = sbr.rel (0) target = $region5
    $region4: #{tpu_custom_call.1} parent=1 // pred_region
      %s19 = ssub.s32 3072, 3072
      %20 = vsyncadd [#allocation3], %s19
      %s21 = sshll.u32 [#allocation2], 4
      %s22 = int_to_ptr.vmem [resolvable:$true] %s21
      %27 = dma.hbm_to_vmem [thread:$0]  %s0, 3072, %s22, [#allocation3], 768, 768, 48
    $region5: #{tpu_custom_call.1} parent=1 // pred_fallthru
      _
    // Predicated region
    $region6: #{tpu_custom_call.1} parent=1 // pred_check
      _
    $region7: #{tpu_custom_call.1} parent=1 // pred_check_branch
      %29 = sbr.rel (0) target = $region9
    $region8: #{tpu_custom_call.1} parent=1 // pred_region
      %s31 = ssub.s32 6144, 6144
      %32 = vsyncadd [#allocation6], %s31
      %s33 = sshll.u32 [#allocation5], 4
      %s34 = int_to_ptr.vmem [resolvable:$true] %s33
      %39 = dma.hbm_to_vmem [thread:$0]  %s1, 6144, %s34, [#allocation6], 384, 384, 24
    $region9: #{tpu_custom_call.1} parent=1 // pred_fallthru
      _
    // Predicated region
    $region10: #{tpu_custom_call.1} parent=1 // pred_check
      _
    $region11: #{tpu_custom_call.1} parent=1 // pred_check_branch
      %41 = sbr.rel (0) target = $region13
    $region12: #{tpu_custom_call.1} parent=1 // pred_region
      %s43 = ssub.s32 6144, 6144
      %44 = vsyncadd [#allocation6], %s43
      %s45 = sshll.u32 [#allocation7], 4
      %s46 = int_to_ptr.vmem [resolvable:$true] %s45
      %51 = dma.hbm_to_vmem [thread:$0]  %s2, 6144, %s46, [#allocation6], 384, 384, 24
    $region13: #{tpu_custom_call.1} parent=1 // pred_fallthru
      _
    // Predicated region
    $region14: #{tpu_custom_call.1} parent=1 // pred_check
      _
    $region15: #{tpu_custom_call.1} parent=1 // pred_check_branch
      %53 = sbr.rel (0) target = $region17
    $region16: #{tpu_custom_call.1} parent=1 // pred_region
      %s55 = ssub.s32 96, 96
      %56 = vsyncadd [#allocation9], %s55
      %s58 = sshll.u32 [#allocation8], 4
      %s59 = int_to_ptr.vmem [resolvable:$true] %s58
      %61 = dma.hbm_to_vmem [thread:$0]  %s3, 96, %s59, [#allocation9]
    $region17: #{tpu_custom_call.1} parent=1 // pred_fallthru
      _
    // Predicated region
    $region18: #{tpu_custom_call.1} parent=1 // pred_check
      _
    $region19: #{tpu_custom_call.1} parent=1 // pred_check_branch
      %63 = sbr.rel (0) target = $region21
    $region20: #{tpu_custom_call.1} parent=1 // pred_region
      %s65 = ssub.s32 2048, 2048
      %66 = vsyncadd [#allocation9], %s65
      %s67 = sshll.u32 [#allocation10], 4
      %s68 = int_to_ptr.vmem [resolvable:$true] %s67
      %73 = dma.hbm_to_vmem [thread:$0]  %s4, 2048, %s68, [#allocation9], 128, 128, 8
    $region21: #{tpu_custom_call.1} parent=1 // pred_fallthru
      _
    // Predicated region
    $region22: #{tpu_custom_call.1} parent=1 // pred_check
      _
    $region23: #{tpu_custom_call.1} parent=1 // pred_check_branch
      %75 = sbr.rel (0) target = $region25
    $region24: #{tpu_custom_call.1} parent=1 // pred_region
      _
    $region25: #{tpu_custom_call.1} parent=1 // pred_fallthru
      _
    // Predicated region
    $region26: #{tpu_custom_call.1} parent=1 // pred_check
      _
    $region27: #{tpu_custom_call.1} parent=1 // pred_check_branch
      %77 = sbr.rel (0) target = $region29
    $region28: #{tpu_custom_call.1} parent=1 // pred_region
      _
    $region29: #{tpu_custom_call.1} parent=1 // pred_fallthru
      _
    // Predicated region
    $region30: #{tpu_custom_call.1} parent=1 // pred_check
      _
    $region31: #{tpu_custom_call.1} parent=1 // pred_check_branch
      %79 = sbr.rel (0) target = $region33
    $region32: #{tpu_custom_call.1} parent=1 // pred_region
      %80 = dma.done [#allocation3], 3072
    $region33: #{tpu_custom_call.1} parent=1 // pred_fallthru
      _
    // Predicated region
    $region34: #{tpu_custom_call.1} parent=1 // pred_check
      _
    $region35: #{tpu_custom_call.1} parent=1 // pred_check_branch
      %82 = sbr.rel (0) target = $region37
    $region36: #{tpu_custom_call.1} parent=1 // pred_region
      %83 = dma.done [#allocation6], 6144
    $region37: #{tpu_custom_call.1} parent=1 // pred_fallthru
      _
    // Predicated region
    $region38: #{tpu_custom_call.1} parent=1 // pred_check
      _
    $region39: #{tpu_custom_call.1} parent=1 // pred_check_branch
      %85 = sbr.rel (0) target = $region41
    $region40: #{tpu_custom_call.1} parent=1 // pred_region
      %86 = dma.done [#allocation6], 6144
    $region41: #{tpu_custom_call.1} parent=1 // pred_fallthru
      _
    // Predicated region
    $region42: #{tpu_custom_call.1} parent=1 // pred_check
      _
    $region43: #{tpu_custom_call.1} parent=1 // pred_check_branch
      %88 = sbr.rel (0) target = $region45
    $region44: #{tpu_custom_call.1} parent=1 // pred_region
      %89 = dma.done [#allocation9], 96
    $region45: #{tpu_custom_call.1} parent=1 // pred_fallthru
      _
    // Predicated region
    $region46: #{tpu_custom_call.1} parent=1 // pred_check
      _
    $region47: #{tpu_custom_call.1} parent=1 // pred_check_branch
      %91 = sbr.rel (0) target = $region49
    $region48: #{tpu_custom_call.1} parent=1 // pred_region
      %92 = dma.done [#allocation9], 2048
    $region49: #{tpu_custom_call.1} parent=1 // pred_fallthru
      _
    %v93 = vld [vmem:[#allocation8] sm:$0x3f]
    %v94 = vld [vmem:[%s5] sm:$0x1]
    %v95 = vld [vmem:[%s6] sm:$0x1]
    %v96 = vlaneseq
    %v97 = vand.u32 %v96, 127
    %vm98 = vcmp.eq.s32.totalorder %v97, 31
    %99 = vst [vmem:[#allocation11] sm:$0x1] 0.0
    %v100 = vld [vmem:[#allocation5] sm:$0xff]
    %v101 = vld [vmem:[#allocation5 + $0x8] sm:$0xff]
    %v102 = vld [vmem:[#allocation5 + $0x10] sm:$0xff]
    %v103 = vld [vmem:[#allocation5 + $0x18] sm:$0xff]
    %v104 = vld [vmem:[#allocation5 + $0x20] sm:$0xff]
    %v105 = vld [vmem:[#allocation5 + $0x28] sm:$0xff]
    %v106 = vld [vmem:[#allocation5 + $0x30] sm:$0xff]
    %v107 = vld [vmem:[#allocation5 + $0x38] sm:$0xff]
    %v108 = vld [vmem:[#allocation5 + $0x40] sm:$0xff]
    %v109 = vld [vmem:[#allocation5 + $0x48] sm:$0xff]
    %v110 = vld [vmem:[#allocation5 + $0x50] sm:$0xff]
    %v111 = vld [vmem:[#allocation5 + $0x58] sm:$0xff]
    %v112 = vld [vmem:[#allocation5 + $0x60] sm:$0xff]
    %v113 = vld [vmem:[#allocation5 + $0x68] sm:$0xff]
    %v114 = vld [vmem:[#allocation5 + $0x70] sm:$0xff]
    %v115 = vld [vmem:[#allocation5 + $0x78] sm:$0xff]
    %v116 = vld [vmem:[#allocation5 + $0x80] sm:$0xff]
    %v117 = vld [vmem:[#allocation5 + $0x88] sm:$0xff]
    %v118 = vld [vmem:[#allocation5 + $0x90] sm:$0xff]
    %v119 = vld [vmem:[#allocation5 + $0x98] sm:$0xff]
    %v120 = vld [vmem:[#allocation5 + $0xa0] sm:$0xff]
    %v121 = vld [vmem:[#allocation5 + $0xa8] sm:$0xff]
    %v122 = vld [vmem:[#allocation5 + $0xb0] sm:$0xff]
    %v123 = vld [vmem:[#allocation5 + $0xb8] sm:$0xff]
    %v124 = vld [vmem:[#allocation5 + $0xc0] sm:$0xff]
    %v125 = vld [vmem:[#allocation5 + $0xc8] sm:$0xff]
    %v126 = vld [vmem:[#allocation5 + $0xd0] sm:$0xff]
    %v127 = vld [vmem:[#allocation5 + $0xd8] sm:$0xff]
    %v128 = vld [vmem:[#allocation5 + $0xe0] sm:$0xff]
    %v129 = vld [vmem:[#allocation5 + $0xe8] sm:$0xff]
    %v130 = vld [vmem:[#allocation5 + $0xf0] sm:$0xff]
    %v131 = vld [vmem:[#allocation5 + $0xf8] sm:$0xff]
    %v132 = vld [vmem:[#allocation5 + $0x100] sm:$0xff]
    %v133 = vld [vmem:[#allocation5 + $0x108] sm:$0xff]
    %v134 = vld [vmem:[#allocation5 + $0x110] sm:$0xff]
    %v135 = vld [vmem:[#allocation5 + $0x118] sm:$0xff]
    %v136 = vld [vmem:[#allocation5 + $0x120] sm:$0xff]
    %v137 = vld [vmem:[#allocation5 + $0x128] sm:$0xff]
    %v138 = vld [vmem:[#allocation5 + $0x130] sm:$0xff]
    %v139 = vld [vmem:[#allocation5 + $0x138] sm:$0xff]
    %v140 = vld [vmem:[#allocation5 + $0x140] sm:$0xff]
    %v141 = vld [vmem:[#allocation5 + $0x148] sm:$0xff]
    %v142 = vld [vmem:[#allocation5 + $0x150] sm:$0xff]
    %v143 = vld [vmem:[#allocation5 + $0x158] sm:$0xff]
    %v144 = vld [vmem:[#allocation5 + $0x160] sm:$0xff]
    %v145 = vld [vmem:[#allocation5 + $0x168] sm:$0xff]
    %v146 = vld [vmem:[#allocation5 + $0x170] sm:$0xff]
    %v147 = vld [vmem:[#allocation5 + $0x178] sm:$0xff]
    %v149 = vlaneseq
    %v150 = vshrl.u32 %v149, 7
    %v151 = vsub.s32 0, %v150
    %v152 = vrot.slane %v93, %v151
    %v153 = vlaneseq
    %v154 = vshrl.u32 %v153, 7
    %v155 = vsub.s32 1, %v154
    %v156 = vrot.slane %v93, %v155
    %v157 = vlaneseq
    %v158 = vshrl.u32 %v157, 7
    %v159 = vsub.s32 2, %v158
    %v160 = vrot.slane %v93, %v159
    %164 = vmatprep.subr.mxu0 %v146
    %165 = vmatpush1.msra.mxu0 %v145
    %166 = vmatprep.subr.mxu0 %v143
    %167 = vmatpush1.msra.mxu0 %v142
    %168 = vmatprep.subr.mxu0 %v140
    %169 = vmatpush1.msra.mxu0 %v139
    %170 = vmatprep.subr.mxu0 %v137
    %171 = vmatpush1.msra.mxu0 %v136
    %172 = vmatprep.subr.mxu0 %v134
    %173 = vmatpush1.msra.mxu0 %v133
    %174 = vmatprep.subr.mxu0 %v131
    %175 = vmatpush1.msra.mxu0 %v130
    %176 = vmatprep.subr.mxu0 %v128
    %177 = vmatpush1.msra.mxu0 %v127
    %178 = vmatprep.subr.mxu0 %v125
    %179 = vmatpush1.msra.mxu0 %v124
    %180 = vmatprep.subr.mxu0 %v122
    %181 = vmatpush1.msra.mxu0 %v121
    %182 = vmatprep.subr.mxu0 %v119
    %183 = vmatpush1.msra.mxu0 %v118
    %184 = vmatprep.subr.mxu0 %v116
    %185 = vmatpush1.msra.mxu0 %v115
    %186 = vmatprep.subr.mxu0 %v113
    %187 = vmatpush1.msra.mxu0 %v112
    %188 = vmatprep.subr.mxu0 %v110
    %189 = vmatpush1.msra.mxu0 %v109
    %190 = vmatprep.subr.mxu0 %v107
    %191 = vmatpush1.msra.mxu0 %v106
    %192 = vmatprep.subr.mxu0 %v104
    %193 = vmatpush1.msra.mxu0 %v103
    %194 = vmatprep.subr.mxu0 %v101
    %195 = vmatpush1.msra.mxu0 %v100
    %196 = vmatprep.subr.mxu0 0.0
    %197 = vmatpush2.msra.mxu0 0.0
    %198 = vmatprep.subr.mxu0 0.0
    %199 = vmatpush2.msra.mxu0 0.0
    %200 = vmatprep.subr.mxu0 0.0
    %201 = vmatpush2.msra.mxu0 0.0
    %202 = vmatprep.subr.mxu0 0.0
    %203 = vmatpush2.msra.mxu0 0.0
    %204 = vmatprep.subr.mxu0 0.0
    %205 = vmatpush2.msra.mxu0 0.0
    %206 = vmatprep.subr.mxu0 0.0
    %207 = vmatpush2.msra.mxu0 0.0
    %208 = vmatprep.subr.mxu0 0.0
    %209 = vmatpush2.msra.mxu0 0.0
    %210 = vmatprep.subr.mxu0 0.0
    %211 = vmatpush2.msra.mxu0 0.0
    %212 = vmatprep.subr.mxu0 0.0
    %213 = vmatpush2.msra.mxu0 0.0
    %214 = vmatprep.subr.mxu0 0.0
    %215 = vmatpush2.msra.mxu0 0.0
    %216 = vmatprep.subr.mxu0 0.0
    %217 = vmatpush2.msra.mxu0 0.0
    %218 = vmatprep.subr.mxu0 0.0
    %219 = vmatpush2.msra.mxu0 0.0
    %220 = vmatprep.subr.mxu0 0.0
    %221 = vmatpush2.msra.mxu0 0.0
    %222 = vmatprep.subr.mxu0 0.0
    %223 = vmatpush2.msra.mxu0 0.0
    %224 = vmatprep.subr.mxu0 0.0
    %225 = vmatpush2.msra.mxu0 0.0
    %226 = vmatprep.subr.mxu0 0.0
    %227 = vmatpush2.msra.mxu0 0.0
    %228 = vmatprep.mubr.f32.mxu0 0.0
    %229 = vmatmul.mubr.f32.gmra.mxu0 %v95
    %v230 = vpop.f32.mrf.mxu0
    %v231 = vadd.f32 %v152, %v230
    %v232 = vpop.f32.mrf.mxu0
    %v233 = vadd.f32 %v156, %v232
    %234 = vdwg.mxu0
    %235 = vmatprep.subr.mxu0 0.0
    %236 = vmatpush1.msra.mxu0 %v147
    %237 = vmatprep.subr.mxu0 0.0
    %238 = vmatpush1.msra.mxu0 %v144
    %239 = vmatprep.subr.mxu0 0.0
    %240 = vmatpush1.msra.mxu0 %v141
    %241 = vmatprep.subr.mxu0 0.0
    %242 = vmatpush1.msra.mxu0 %v138
    %243 = vmatprep.subr.mxu0 0.0
    %244 = vmatpush1.msra.mxu0 %v135
    %245 = vmatprep.subr.mxu0 0.0
    %246 = vmatpush1.msra.mxu0 %v132
    %247 = vmatprep.subr.mxu0 0.0
    %248 = vmatpush1.msra.mxu0 %v129
    %249 = vmatprep.subr.mxu0 0.0
    %250 = vmatpush1.msra.mxu0 %v126
    %251 = vmatprep.subr.mxu0 0.0
    %252 = vmatpush1.msra.mxu0 %v123
    %253 = vmatprep.subr.mxu0 0.0
    %254 = vmatpush1.msra.mxu0 %v120
    %255 = vmatprep.subr.mxu0 0.0
    %256 = vmatpush1.msra.mxu0 %v117
    %257 = vmatprep.subr.mxu0 0.0
    %258 = vmatpush1.msra.mxu0 %v114
    %259 = vmatprep.subr.mxu0 0.0
    %260 = vmatpush1.msra.mxu0 %v111
    %261 = vmatprep.subr.mxu0 0.0
    %262 = vmatpush1.msra.mxu0 %v108
    %263 = vmatprep.subr.mxu0 0.0
    %264 = vmatpush1.msra.mxu0 %v105
    %265 = vmatprep.subr.mxu0 0.0
    %266 = vmatpush1.msra.mxu0 %v102
    %267 = vmatprep.subr.mxu0 0.0
    %268 = vmatpush2.msra.mxu0 0.0
    %269 = vmatprep.subr.mxu0 0.0
    %270 = vmatpush2.msra.mxu0 0.0
    %271 = vmatprep.subr.mxu0 0.0
    %272 = vmatpush2.msra.mxu0 0.0
    %273 = vmatprep.subr.mxu0 0.0
    %274 = vmatpush2.msra.mxu0 0.0
    %275 = vmatprep.subr.mxu0 0.0
    %276 = vmatpush2.msra.mxu0 0.0
    %277 = vmatprep.subr.mxu0 0.0
    %278 = vmatpush2.msra.mxu0 0.0
    %279 = vmatprep.subr.mxu0 0.0
    %280 = vmatpush2.msra.mxu0 0.0
    %281 = vmatprep.subr.mxu0 0.0
    %282 = vmatpush2.msra.mxu0 0.0
    %283 = vmatprep.subr.mxu0 0.0
    %284 = vmatpush2.msra.mxu0 0.0
    %285 = vmatprep.subr.mxu0 0.0
    %286 = vmatpush2.msra.mxu0 0.0
    %287 = vmatprep.subr.mxu0 0.0
    %288 = vmatpush2.msra.mxu0 0.0
    %289 = vmatprep.subr.mxu0 0.0
    %290 = vmatpush2.msra.mxu0 0.0
    %291 = vmatprep.subr.mxu0 0.0
    %292 = vmatpush2.msra.mxu0 0.0
    %293 = vmatprep.subr.mxu0 0.0
    %294 = vmatpush2.msra.mxu0 0.0
    %295 = vmatprep.subr.mxu0 0.0
    %296 = vmatpush2.msra.mxu0 0.0
    %297 = vmatprep.subr.mxu0 0.0
    %298 = vmatpush2.msra.mxu0 0.0
    %299 = vmatprep.mubr.f32.mxu0 0.0
    %300 = vmatmul.mubr.f32.gmra.mxu0 %v95
    %v301 = vpop.f32.mrf.mxu0
    %v302 = vadd.f32 %v160, %v301
    %v303 = vpop.f32.mrf.mxu0
    %304 = vdwg.mxu0
    %v305 = vld [vmem:[#allocation7] sm:$0xff]
    %v306 = vld [vmem:[#allocation7 + $0x8] sm:$0xff]
    %v307 = vld [vmem:[#allocation7 + $0x10] sm:$0xff]
    %v308 = vld [vmem:[#allocation7 + $0x18] sm:$0xff]
    %v309 = vld [vmem:[#allocation7 + $0x20] sm:$0xff]
    %v310 = vld [vmem:[#allocation7 + $0x28] sm:$0xff]
    %v311 = vld [vmem:[#allocation7 + $0x30] sm:$0xff]
    %v312 = vld [vmem:[#allocation7 + $0x38] sm:$0xff]
    %v313 = vld [vmem:[#allocation7 + $0x40] sm:$0xff]
    %v314 = vld [vmem:[#allocation7 + $0x48] sm:$0xff]
    %v315 = vld [vmem:[#allocation7 + $0x50] sm:$0xff]
    %v316 = vld [vmem:[#allocation7 + $0x58] sm:$0xff]
    %v317 = vld [vmem:[#allocation7 + $0x60] sm:$0xff]
    %v318 = vld [vmem:[#allocation7 + $0x68] sm:$0xff]
    %v319 = vld [vmem:[#allocation7 + $0x70] sm:$0xff]
    %v320 = vld [vmem:[#allocation7 + $0x78] sm:$0xff]
    %v321 = vld [vmem:[#allocation7 + $0x80] sm:$0xff]
    %v322 = vld [vmem:[#allocation7 + $0x88] sm:$0xff]
    %v323 = vld [vmem:[#allocation7 + $0x90] sm:$0xff]
    %v324 = vld [vmem:[#allocation7 + $0x98] sm:$0xff]
    %v325 = vld [vmem:[#allocation7 + $0xa0] sm:$0xff]
    %v326 = vld [vmem:[#allocation7 + $0xa8] sm:$0xff]
    %v327 = vld [vmem:[#allocation7 + $0xb0] sm:$0xff]
    %v328 = vld [vmem:[#allocation7 + $0xb8] sm:$0xff]
    %v329 = vld [vmem:[#allocation7 + $0xc0] sm:$0xff]
    %v330 = vld [vmem:[#allocation7 + $0xc8] sm:$0xff]
    %v331 = vld [vmem:[#allocation7 + $0xd0] sm:$0xff]
    %v332 = vld [vmem:[#allocation7 + $0xd8] sm:$0xff]
    %v333 = vld [vmem:[#allocation7 + $0xe0] sm:$0xff]
    %v334 = vld [vmem:[#allocation7 + $0xe8] sm:$0xff]
    %v335 = vld [vmem:[#allocation7 + $0xf0] sm:$0xff]
    %v336 = vld [vmem:[#allocation7 + $0xf8] sm:$0xff]
    %v337 = vld [vmem:[#allocation7 + $0x100] sm:$0xff]
    %v338 = vld [vmem:[#allocation7 + $0x108] sm:$0xff]
    %v339 = vld [vmem:[#allocation7 + $0x110] sm:$0xff]
    %v340 = vld [vmem:[#allocation7 + $0x118] sm:$0xff]
    %v341 = vld [vmem:[#allocation7 + $0x120] sm:$0xff]
    %v342 = vld [vmem:[#allocation7 + $0x128] sm:$0xff]
    %v343 = vld [vmem:[#allocation7 + $0x130] sm:$0xff]
    %v344 = vld [vmem:[#allocation7 + $0x138] sm:$0xff]
    %v345 = vld [vmem:[#allocation7 + $0x140] sm:$0xff]
    %v346 = vld [vmem:[#allocation7 + $0x148] sm:$0xff]
    %v347 = vld [vmem:[#allocation7 + $0x150] sm:$0xff]
    %v348 = vld [vmem:[#allocation7 + $0x158] sm:$0xff]
    %v349 = vld [vmem:[#allocation7 + $0x160] sm:$0xff]
    %v350 = vld [vmem:[#allocation7 + $0x168] sm:$0xff]
    %v351 = vld [vmem:[#allocation7 + $0x170] sm:$0xff]
    %v352 = vld [vmem:[#allocation7 + $0x178] sm:$0xff]
    %v353 = vlaneseq
    %v354 = vshrl.u32 %v353, 7
    %v355 = vsub.s32 3, %v354
    %v356 = vrot.slane %v93, %v355
    %v357 = vlaneseq
    %v358 = vshrl.u32 %v357, 7
    %v359 = vsub.s32 4, %v358
    %v360 = vrot.slane %v93, %v359
    %v361 = vlaneseq
    %v362 = vshrl.u32 %v361, 7
    %v363 = vsub.s32 5, %v362
    %v364 = vrot.slane %v93, %v363
    %368 = vmatprep.subr.mxu0 %v351
    %369 = vmatpush1.msra.mxu0 %v350
    %370 = vmatprep.subr.mxu0 %v348
    %371 = vmatpush1.msra.mxu0 %v347
    %372 = vmatprep.subr.mxu0 %v345
    %373 = vmatpush1.msra.mxu0 %v344
    %374 = vmatprep.subr.mxu0 %v342
    %375 = vmatpush1.msra.mxu0 %v341
    %376 = vmatprep.subr.mxu0 %v339
    %377 = vmatpush1.msra.mxu0 %v338
    %378 = vmatprep.subr.mxu0 %v336
    %379 = vmatpush1.msra.mxu0 %v335
    %380 = vmatprep.subr.mxu0 %v333
    %381 = vmatpush1.msra.mxu0 %v332
    %382 = vmatprep.subr.mxu0 %v330
    %383 = vmatpush1.msra.mxu0 %v329
    %384 = vmatprep.subr.mxu0 %v327
    %385 = vmatpush1.msra.mxu0 %v326
    %386 = vmatprep.subr.mxu0 %v324
    %387 = vmatpush1.msra.mxu0 %v323
    %388 = vmatprep.subr.mxu0 %v321
    %389 = vmatpush1.msra.mxu0 %v320
    %390 = vmatprep.subr.mxu0 %v318
    %391 = vmatpush1.msra.mxu0 %v317
    %392 = vmatprep.subr.mxu0 %v315
    %393 = vmatpush1.msra.mxu0 %v314
    %394 = vmatprep.subr.mxu0 %v312
    %395 = vmatpush1.msra.mxu0 %v311
    %396 = vmatprep.subr.mxu0 %v309
    %397 = vmatpush1.msra.mxu0 %v308
    %398 = vmatprep.subr.mxu0 %v306
    %399 = vmatpush1.msra.mxu0 %v305
    %400 = vmatprep.subr.mxu0 0.0
    %401 = vmatpush2.msra.mxu0 0.0
    %402 = vmatprep.subr.mxu0 0.0
    %403 = vmatpush2.msra.mxu0 0.0
    %404 = vmatprep.subr.mxu0 0.0
    %405 = vmatpush2.msra.mxu0 0.0
    %406 = vmatprep.subr.mxu0 0.0
    %407 = vmatpush2.msra.mxu0 0.0
    %408 = vmatprep.subr.mxu0 0.0
    %409 = vmatpush2.msra.mxu0 0.0
    %410 = vmatprep.subr.mxu0 0.0
    %411 = vmatpush2.msra.mxu0 0.0
    %412 = vmatprep.subr.mxu0 0.0
    %413 = vmatpush2.msra.mxu0 0.0
    %414 = vmatprep.subr.mxu0 0.0
    %415 = vmatpush2.msra.mxu0 0.0
    %416 = vmatprep.subr.mxu0 0.0
    %417 = vmatpush2.msra.mxu0 0.0
    %418 = vmatprep.subr.mxu0 0.0
    %419 = vmatpush2.msra.mxu0 0.0
    %420 = vmatprep.subr.mxu0 0.0
    %421 = vmatpush2.msra.mxu0 0.0
    %422 = vmatprep.subr.mxu0 0.0
    %423 = vmatpush2.msra.mxu0 0.0
    %424 = vmatprep.subr.mxu0 0.0
    %425 = vmatpush2.msra.mxu0 0.0
    %426 = vmatprep.subr.mxu0 0.0
    %427 = vmatpush2.msra.mxu0 0.0
    %428 = vmatprep.subr.mxu0 0.0
    %429 = vmatpush2.msra.mxu0 0.0
    %430 = vmatprep.subr.mxu0 0.0
    %431 = vmatpush2.msra.mxu0 0.0
    %432 = vmatprep.mubr.f32.mxu0 0.0
    %433 = vmatmul.mubr.f32.gmra.mxu0 %v95
    %v434 = vpop.f32.mrf.mxu0
    %v435 = vadd.f32 %v356, %v434
    %v436 = vpop.f32.mrf.mxu0
    %v437 = vadd.f32 %v360, %v436
    %438 = vdwg.mxu0
    %439 = vmatprep.subr.mxu0 0.0
    %440 = vmatpush1.msra.mxu0 %v352
    %441 = vmatprep.subr.mxu0 0.0
    %442 = vmatpush1.msra.mxu0 %v349
    %443 = vmatprep.subr.mxu0 0.0
    %444 = vmatpush1.msra.mxu0 %v346
    %445 = vmatprep.subr.mxu0 0.0
    %446 = vmatpush1.msra.mxu0 %v343
    %447 = vmatprep.subr.mxu0 0.0
    %448 = vmatpush1.msra.mxu0 %v340
    %449 = vmatprep.subr.mxu0 0.0
    %450 = vmatpush1.msra.mxu0 %v337
    %451 = vmatprep.subr.mxu0 0.0
    %452 = vmatpush1.msra.mxu0 %v334
    %453 = vmatprep.subr.mxu0 0.0
    %454 = vmatpush1.msra.mxu0 %v331
    %455 = vmatprep.subr.mxu0 0.0
    %456 = vmatpush1.msra.mxu0 %v328
    %457 = vmatprep.subr.mxu0 0.0
    %458 = vmatpush1.msra.mxu0 %v325
    %459 = vmatprep.subr.mxu0 0.0
    %460 = vmatpush1.msra.mxu0 %v322
    %461 = vmatprep.subr.mxu0 0.0
    %462 = vmatpush1.msra.mxu0 %v319
    %463 = vmatprep.subr.mxu0 0.0
    %464 = vmatpush1.msra.mxu0 %v316
    %465 = vmatprep.subr.mxu0 0.0
    %466 = vmatpush1.msra.mxu0 %v313
    %467 = vmatprep.subr.mxu0 0.0
    %468 = vmatpush1.msra.mxu0 %v310
    %469 = vmatprep.subr.mxu0 0.0
    %470 = vmatpush1.msra.mxu0 %v307
    %471 = vmatprep.subr.mxu0 0.0
    %472 = vmatpush2.msra.mxu0 0.0
    %473 = vmatprep.subr.mxu0 0.0
    %474 = vmatpush2.msra.mxu0 0.0
    %475 = vmatprep.subr.mxu0 0.0
    %476 = vmatpush2.msra.mxu0 0.0
    %477 = vmatprep.subr.mxu0 0.0
    %478 = vmatpush2.msra.mxu0 0.0
    %479 = vmatprep.subr.mxu0 0.0
    %480 = vmatpush2.msra.mxu0 0.0
    %481 = vmatprep.subr.mxu0 0.0
    %482 = vmatpush2.msra.mxu0 0.0
    %483 = vmatprep.subr.mxu0 0.0
    %484 = vmatpush2.msra.mxu0 0.0
    %485 = vmatprep.subr.mxu0 0.0
    %486 = vmatpush2.msra.mxu0 0.0
    %487 = vmatprep.subr.mxu0 0.0
    %488 = vmatpush2.msra.mxu0 0.0
    %489 = vmatprep.subr.mxu0 0.0
    %490 = vmatpush2.msra.mxu0 0.0
    %491 = vmatprep.subr.mxu0 0.0
    %492 = vmatpush2.msra.mxu0 0.0
    %493 = vmatprep.subr.mxu0 0.0
    %494 = vmatpush2.msra.mxu0 0.0
    %495 = vmatprep.subr.mxu0 0.0
    %496 = vmatpush2.msra.mxu0 0.0
    %497 = vmatprep.subr.mxu0 0.0
    %498 = vmatpush2.msra.mxu0 0.0
    %499 = vmatprep.subr.mxu0 0.0
    %500 = vmatpush2.msra.mxu0 0.0
    %501 = vmatprep.subr.mxu0 0.0
    %502 = vmatpush2.msra.mxu0 0.0
    %503 = vmatprep.mubr.f32.mxu0 0.0
    %504 = vmatmul.mubr.f32.gmra.mxu0 %v95
    %v505 = vpop.f32.mrf.mxu0
    %v506 = vadd.f32 %v364, %v505
    %v507 = vpop.f32.mrf.mxu0
    %508 = vdwg.mxu0
    loop: start=1, step=1, limit=8
    $region50: #{tpu_custom_call.1} parent=1 // loop_pre_header
      _
    $region51: #{tpu_custom_call.1} parent=1 // loop_header
      %s510 = sphi 1, %s514
      %p511 = scmp.ge.s32.totalorder %s510, 8
      %s515 = sphi 31, %s1077
      %v516 = vphi %v95, %v560
      %v517 = vphi %v95, %v587
      %v518 = vphi %v231, %v703
      %v519 = vphi %v233, %v705
      %v520 = vphi %v302, %v774
      %v521 = vphi %v435, %v892
      %v522 = vphi %v437, %v894
      %v523 = vphi %v506, %v963
    $region52: #{tpu_custom_call.1} parent=1 // loop_header_branch
      %513 = sbr.rel (%p511) target = $region56
    $region53: #{tpu_custom_call.1} parent=1 // loop_body
      %s524 = sshra.s32 %s515, 3
      %s525 = sand.u32 %s515, 7
      %s526 = sshra.s32 %s515, 3
      %s527 = sand.u32 %s515, 7
      %s528 = smul.u32 %s524, 6
      %s529 = smul.u32 %s528, 8
      %s530 = sadd.s32 %s529, %s527
      %s531 = scalar_lea.vmem [#allocation2], %s530
      %v532 = vld [vmem:[%s531] ss:$8 sm:$0xf]
      %v533 = vld [vmem:[%s531] ss:$8 sm:$0x30]
      %v534 = vor.u32 %v532, %v533
      %v535 = vadd.f32 %v534, %v518
      %v536 = vxor.u32 %v535, 2147483648
      %v537 = vmul.f32 %v536, 1.442695
      %v538 = vpow.pop %v537
      %v539 = vadd.f32 %v538, 1.0
      %v540 = vrcp.pop %v539
      %v541 = vmul.f32 1.0, %v540
      %v543 = vrot.slane %v534, 1
      %v545 = vadd.f32 %v543, %v519
      %v546 = vxor.u32 %v545, 2147483648
      %v547 = vmul.f32 %v546, 1.442695
      %v548 = vpow.pop %v547
      %v549 = vadd.f32 %v548, 1.0
      %v550 = vrcp.pop %v549
      %v551 = vmul.f32 1.0, %v550
      %v552 = vmul.f32 %v541, %v520
      %v553 = vrot.slane %v534, 2
      %v555 = vadd.f32 %v553, %v552
      %v556 = vtanh.pop %v555
      %v557 = vsub.f32 1.0, %v551
      %v558 = vmul.f32 %v557, %v556
      %v559 = vmul.f32 %v551, %v516
      %v560 = vadd.f32 %v558, %v559
      %v561 = vrot.slane %v534, 3
      %v563 = vadd.f32 %v561, %v521
      %v564 = vxor.u32 %v563, 2147483648
      %v565 = vmul.f32 %v564, 1.442695
      %v566 = vpow.pop %v565
      %v567 = vadd.f32 %v566, 1.0
      %v568 = vrcp.pop %v567
      %v569 = vmul.f32 1.0, %v568
      %v570 = vrot.slane %v534, 4
      %v572 = vadd.f32 %v570, %v522
      %v573 = vxor.u32 %v572, 2147483648
      %v574 = vmul.f32 %v573, 1.442695
      %v575 = vpow.pop %v574
      %v576 = vadd.f32 %v575, 1.0
      %v577 = vrcp.pop %v576
      %v578 = vmul.f32 1.0, %v577
      %v579 = vmul.f32 %v569, %v523
      %v580 = vrot.slane %v534, 5
      %v582 = vadd.f32 %v580, %v579
      %v583 = vtanh.pop %v582
      %v584 = vsub.f32 1.0, %v578
      %v585 = vmul.f32 %v584, %v583
      %v586 = vmul.f32 %v578, %v517
      %v587 = vadd.f32 %v585, %v586
      %v588 = vld [vmem:[#allocation5] sm:$0xff]
      %v589 = vld [vmem:[#allocation5 + $0x8] sm:$0xff]
      %v590 = vld [vmem:[#allocation5 + $0x10] sm:$0xff]
      %v591 = vld [vmem:[#allocation5 + $0x18] sm:$0xff]
      %v592 = vld [vmem:[#allocation5 + $0x20] sm:$0xff]
      %v593 = vld [vmem:[#allocation5 + $0x28] sm:$0xff]
      %v594 = vld [vmem:[#allocation5 + $0x30] sm:$0xff]
      %v595 = vld [vmem:[#allocation5 + $0x38] sm:$0xff]
      %v596 = vld [vmem:[#allocation5 + $0x40] sm:$0xff]
      %v597 = vld [vmem:[#allocation5 + $0x48] sm:$0xff]
      %v598 = vld [vmem:[#allocation5 + $0x50] sm:$0xff]
      %v599 = vld [vmem:[#allocation5 + $0x58] sm:$0xff]
      %v600 = vld [vmem:[#allocation5 + $0x60] sm:$0xff]
      %v601 = vld [vmem:[#allocation5 + $0x68] sm:$0xff]
      %v602 = vld [vmem:[#allocation5 + $0x70] sm:$0xff]
      %v603 = vld [vmem:[#allocation5 + $0x78] sm:$0xff]
      %v604 = vld [vmem:[#allocation5 + $0x80] sm:$0xff]
      %v605 = vld [vmem:[#allocation5 + $0x88] sm:$0xff]
      %v606 = vld [vmem:[#allocation5 + $0x90] sm:$0xff]
      %v607 = vld [vmem:[#allocation5 + $0x98] sm:$0xff]
      %v608 = vld [vmem:[#allocation5 + $0xa0] sm:$0xff]
      %v609 = vld [vmem:[#allocation5 + $0xa8] sm:$0xff]
      %v610 = vld [vmem:[#allocation5 + $0xb0] sm:$0xff]
      %v611 = vld [vmem:[#allocation5 + $0xb8] sm:$0xff]
      %v612 = vld [vmem:[#allocation5 + $0xc0] sm:$0xff]
      %v613 = vld [vmem:[#allocation5 + $0xc8] sm:$0xff]
      %v614 = vld [vmem:[#allocation5 + $0xd0] sm:$0xff]
      %v615 = vld [vmem:[#allocation5 + $0xd8] sm:$0xff]
      %v616 = vld [vmem:[#allocation5 + $0xe0] sm:$0xff]
      %v617 = vld [vmem:[#allocation5 + $0xe8] sm:$0xff]
      %v618 = vld [vmem:[#allocation5 + $0xf0] sm:$0xff]
      %v619 = vld [vmem:[#allocation5 + $0xf8] sm:$0xff]
      %v620 = vld [vmem:[#allocation5 + $0x100] sm:$0xff]
      %v621 = vld [vmem:[#allocation5 + $0x108] sm:$0xff]
      %v622 = vld [vmem:[#allocation5 + $0x110] sm:$0xff]
      %v623 = vld [vmem:[#allocation5 + $0x118] sm:$0xff]
      %v624 = vld [vmem:[#allocation5 + $0x120] sm:$0xff]
      %v625 = vld [vmem:[#allocation5 + $0x128] sm:$0xff]
      %v626 = vld [vmem:[#allocation5 + $0x130] sm:$0xff]
      %v627 = vld [vmem:[#allocation5 + $0x138] sm:$0xff]
      %v628 = vld [vmem:[#allocation5 + $0x140] sm:$0xff]
      %v629 = vld [vmem:[#allocation5 + $0x148] sm:$0xff]
      %v630 = vld [vmem:[#allocation5 + $0x150] sm:$0xff]
      %v631 = vld [vmem:[#allocation5 + $0x158] sm:$0xff]
      %v632 = vld [vmem:[#allocation5 + $0x160] sm:$0xff]
      %v633 = vld [vmem:[#allocation5 + $0x168] sm:$0xff]
      %v634 = vld [vmem:[#allocation5 + $0x170] sm:$0xff]
      %v635 = vld [vmem:[#allocation5 + $0x178] sm:$0xff]
      %636 = vmatprep.subr.mxu0 %v634
      %637 = vmatpush1.msra.mxu0 %v633
      %638 = vmatprep.subr.mxu0 %v631
      %639 = vmatpush1.msra.mxu0 %v630
      %640 = vmatprep.subr.mxu0 %v628
      %641 = vmatpush1.msra.mxu0 %v627
      %642 = vmatprep.subr.mxu0 %v625
      %643 = vmatpush1.msra.mxu0 %v624
      %644 = vmatprep.subr.mxu0 %v622
      %645 = vmatpush1.msra.mxu0 %v621
      %646 = vmatprep.subr.mxu0 %v619
      %647 = vmatpush1.msra.mxu0 %v618
      %648 = vmatprep.subr.mxu0 %v616
      %649 = vmatpush1.msra.mxu0 %v615
      %650 = vmatprep.subr.mxu0 %v613
      %651 = vmatpush1.msra.mxu0 %v612
      %652 = vmatprep.subr.mxu0 %v610
      %653 = vmatpush1.msra.mxu0 %v609
      %654 = vmatprep.subr.mxu0 %v607
      %655 = vmatpush1.msra.mxu0 %v606
      %656 = vmatprep.subr.mxu0 %v604
      %657 = vmatpush1.msra.mxu0 %v603
      %658 = vmatprep.subr.mxu0 %v601
      %659 = vmatpush1.msra.mxu0 %v600
      %660 = vmatprep.subr.mxu0 %v598
      %661 = vmatpush1.msra.mxu0 %v597
      %662 = vmatprep.subr.mxu0 %v595
      %663 = vmatpush1.msra.mxu0 %v594
      %664 = vmatprep.subr.mxu0 %v592
      %665 = vmatpush1.msra.mxu0 %v591
      %666 = vmatprep.subr.mxu0 %v589
      %667 = vmatpush1.msra.mxu0 %v588
      %668 = vmatprep.subr.mxu0 0.0
      %669 = vmatpush2.msra.mxu0 0.0
      %670 = vmatprep.subr.mxu0 0.0
      %671 = vmatpush2.msra.mxu0 0.0
      %672 = vmatprep.subr.mxu0 0.0
      %673 = vmatpush2.msra.mxu0 0.0
      %674 = vmatprep.subr.mxu0 0.0
      %675 = vmatpush2.msra.mxu0 0.0
      %676 = vmatprep.subr.mxu0 0.0
      %677 = vmatpush2.msra.mxu0 0.0
      %678 = vmatprep.subr.mxu0 0.0
      %679 = vmatpush2.msra.mxu0 0.0
      %680 = vmatprep.subr.mxu0 0.0
      %681 = vmatpush2.msra.mxu0 0.0
      %682 = vmatprep.subr.mxu0 0.0
      %683 = vmatpush2.msra.mxu0 0.0
      %684 = vmatprep.subr.mxu0 0.0
      %685 = vmatpush2.msra.mxu0 0.0
      %686 = vmatprep.subr.mxu0 0.0
      %687 = vmatpush2.msra.mxu0 0.0
      %688 = vmatprep.subr.mxu0 0.0
      %689 = vmatpush2.msra.mxu0 0.0
      %690 = vmatprep.subr.mxu0 0.0
      %691 = vmatpush2.msra.mxu0 0.0
      %692 = vmatprep.subr.mxu0 0.0
      %693 = vmatpush2.msra.mxu0 0.0
      %694 = vmatprep.subr.mxu0 0.0
      %695 = vmatpush2.msra.mxu0 0.0
      %696 = vmatprep.subr.mxu0 0.0
      %697 = vmatpush2.msra.mxu0 0.0
      %698 = vmatprep.subr.mxu0 0.0
      %699 = vmatpush2.msra.mxu0 0.0
      %700 = vmatprep.mubr.f32.mxu0 0.0
      %701 = vmatmul.mubr.f32.gmra.mxu0 %v560
      %v702 = vpop.f32.mrf.mxu0
      %v703 = vadd.f32 %v152, %v702
      %v704 = vpop.f32.mrf.mxu0
      %v705 = vadd.f32 %v156, %v704
      %706 = vdwg.mxu0
      %707 = vmatprep.subr.mxu0 0.0
      %708 = vmatpush1.msra.mxu0 %v635
      %709 = vmatprep.subr.mxu0 0.0
      %710 = vmatpush1.msra.mxu0 %v632
      %711 = vmatprep.subr.mxu0 0.0
      %712 = vmatpush1.msra.mxu0 %v629
      %713 = vmatprep.subr.mxu0 0.0
      %714 = vmatpush1.msra.mxu0 %v626
      %715 = vmatprep.subr.mxu0 0.0
      %716 = vmatpush1.msra.mxu0 %v623
      %717 = vmatprep.subr.mxu0 0.0
      %718 = vmatpush1.msra.mxu0 %v620
      %719 = vmatprep.subr.mxu0 0.0
      %720 = vmatpush1.msra.mxu0 %v617
      %721 = vmatprep.subr.mxu0 0.0
      %722 = vmatpush1.msra.mxu0 %v614
      %723 = vmatprep.subr.mxu0 0.0
      %724 = vmatpush1.msra.mxu0 %v611
      %725 = vmatprep.subr.mxu0 0.0
      %726 = vmatpush1.msra.mxu0 %v608
      %727 = vmatprep.subr.mxu0 0.0
      %728 = vmatpush1.msra.mxu0 %v605
      %729 = vmatprep.subr.mxu0 0.0
      %730 = vmatpush1.msra.mxu0 %v602
      %731 = vmatprep.subr.mxu0 0.0
      %732 = vmatpush1.msra.mxu0 %v599
      %733 = vmatprep.subr.mxu0 0.0
      %734 = vmatpush1.msra.mxu0 %v596
      %735 = vmatprep.subr.mxu0 0.0
      %736 = vmatpush1.msra.mxu0 %v593
      %737 = vmatprep.subr.mxu0 0.0
      %738 = vmatpush1.msra.mxu0 %v590
      %739 = vmatprep.subr.mxu0 0.0
      %740 = vmatpush2.msra.mxu0 0.0
      %741 = vmatprep.subr.mxu0 0.0
      %742 = vmatpush2.msra.mxu0 0.0
      %743 = vmatprep.subr.mxu0 0.0
      %744 = vmatpush2.msra.mxu0 0.0
      %745 = vmatprep.subr.mxu0 0.0
      %746 = vmatpush2.msra.mxu0 0.0
      %747 = vmatprep.subr.mxu0 0.0
      %748 = vmatpush2.msra.mxu0 0.0
      %749 = vmatprep.subr.mxu0 0.0
      %750 = vmatpush2.msra.mxu0 0.0
      %751 = vmatprep.subr.mxu0 0.0
      %752 = vmatpush2.msra.mxu0 0.0
      %753 = vmatprep.subr.mxu0 0.0
      %754 = vmatpush2.msra.mxu0 0.0
      %755 = vmatprep.subr.mxu0 0.0
      %756 = vmatpush2.msra.mxu0 0.0
      %757 = vmatprep.subr.mxu0 0.0
      %758 = vmatpush2.msra.mxu0 0.0
      %759 = vmatprep.subr.mxu0 0.0
      %760 = vmatpush2.msra.mxu0 0.0
      %761 = vmatprep.subr.mxu0 0.0
      %762 = vmatpush2.msra.mxu0 0.0
      %763 = vmatprep.subr.mxu0 0.0
      %764 = vmatpush2.msra.mxu0 0.0
      %765 = vmatprep.subr.mxu0 0.0
      %766 = vmatpush2.msra.mxu0 0.0
      %767 = vmatprep.subr.mxu0 0.0
      %768 = vmatpush2.msra.mxu0 0.0
      %769 = vmatprep.subr.mxu0 0.0
      %770 = vmatpush2.msra.mxu0 0.0
      %771 = vmatprep.mubr.f32.mxu0 0.0
      %772 = vmatmul.mubr.f32.gmra.mxu0 %v560
      %v773 = vpop.f32.mrf.mxu0
      %v774 = vadd.f32 %v160, %v773
      %v775 = vpop.f32.mrf.mxu0
      %776 = vdwg.mxu0
      %v777 = vld [vmem:[#allocation7] sm:$0xff]
      %v778 = vld [vmem:[#allocation7 + $0x8] sm:$0xff]
      %v779 = vld [vmem:[#allocation7 + $0x10] sm:$0xff]
      %v780 = vld [vmem:[#allocation7 + $0x18] sm:$0xff]
      %v781 = vld [vmem:[#allocation7 + $0x20] sm:$0xff]
      %v782 = vld [vmem:[#allocation7 + $0x28] sm:$0xff]
      %v783 = vld [vmem:[#allocation7 + $0x30] sm:$0xff]
      %v784 = vld [vmem:[#allocation7 + $0x38] sm:$0xff]
      %v785 = vld [vmem:[#allocation7 + $0x40] sm:$0xff]
      %v786 = vld [vmem:[#allocation7 + $0x48] sm:$0xff]
      %v787 = vld [vmem:[#allocation7 + $0x50] sm:$0xff]
      %v788 = vld [vmem:[#allocation7 + $0x58] sm:$0xff]
      %v789 = vld [vmem:[#allocation7 + $0x60] sm:$0xff]
      %v790 = vld [vmem:[#allocation7 + $0x68] sm:$0xff]
      %v791 = vld [vmem:[#allocation7 + $0x70] sm:$0xff]
      %v792 = vld [vmem:[#allocation7 + $0x78] sm:$0xff]
      %v793 = vld [vmem:[#allocation7 + $0x80] sm:$0xff]
      %v794 = vld [vmem:[#allocation7 + $0x88] sm:$0xff]
      %v795 = vld [vmem:[#allocation7 + $0x90] sm:$0xff]
      %v796 = vld [vmem:[#allocation7 + $0x98] sm:$0xff]
      %v797 = vld [vmem:[#allocation7 + $0xa0] sm:$0xff]
      %v798 = vld [vmem:[#allocation7 + $0xa8] sm:$0xff]
      %v799 = vld [vmem:[#allocation7 + $0xb0] sm:$0xff]
      %v800 = vld [vmem:[#allocation7 + $0xb8] sm:$0xff]
      %v801 = vld [vmem:[#allocation7 + $0xc0] sm:$0xff]
      %v802 = vld [vmem:[#allocation7 + $0xc8] sm:$0xff]
      %v803 = vld [vmem:[#allocation7 + $0xd0] sm:$0xff]
      %v804 = vld [vmem:[#allocation7 + $0xd8] sm:$0xff]
      %v805 = vld [vmem:[#allocation7 + $0xe0] sm:$0xff]
      %v806 = vld [vmem:[#allocation7 + $0xe8] sm:$0xff]
      %v807 = vld [vmem:[#allocation7 + $0xf0] sm:$0xff]
      %v808 = vld [vmem:[#allocation7 + $0xf8] sm:$0xff]
      %v809 = vld [vmem:[#allocation7 + $0x100] sm:$0xff]
      %v810 = vld [vmem:[#allocation7 + $0x108] sm:$0xff]
      %v811 = vld [vmem:[#allocation7 + $0x110] sm:$0xff]
      %v812 = vld [vmem:[#allocation7 + $0x118] sm:$0xff]
      %v813 = vld [vmem:[#allocation7 + $0x120] sm:$0xff]
      %v814 = vld [vmem:[#allocation7 + $0x128] sm:$0xff]
      %v815 = vld [vmem:[#allocation7 + $0x130] sm:$0xff]
      %v816 = vld [vmem:[#allocation7 + $0x138] sm:$0xff]
      %v817 = vld [vmem:[#allocation7 + $0x140] sm:$0xff]
      %v818 = vld [vmem:[#allocation7 + $0x148] sm:$0xff]
      %v819 = vld [vmem:[#allocation7 + $0x150] sm:$0xff]
      %v820 = vld [vmem:[#allocation7 + $0x158] sm:$0xff]
      %v821 = vld [vmem:[#allocation7 + $0x160] sm:$0xff]
      %v822 = vld [vmem:[#allocation7 + $0x168] sm:$0xff]
      %v823 = vld [vmem:[#allocation7 + $0x170] sm:$0xff]
      %v824 = vld [vmem:[#allocation7 + $0x178] sm:$0xff]
      %825 = vmatprep.subr.mxu0 %v823
      %826 = vmatpush1.msra.mxu0 %v822
      %827 = vmatprep.subr.mxu0 %v820
      %828 = vmatpush1.msra.mxu0 %v819
      %829 = vmatprep.subr.mxu0 %v817
      %830 = vmatpush1.msra.mxu0 %v816
      %831 = vmatprep.subr.mxu0 %v814
      %832 = vmatpush1.msra.mxu0 %v813
      %833 = vmatprep.subr.mxu0 %v811
      %834 = vmatpush1.msra.mxu0 %v810
      %835 = vmatprep.subr.mxu0 %v808
      %836 = vmatpush1.msra.mxu0 %v807
      %837 = vmatprep.subr.mxu0 %v805
      %838 = vmatpush1.msra.mxu0 %v804
      %839 = vmatprep.subr.mxu0 %v802
      %840 = vmatpush1.msra.mxu0 %v801
      %841 = vmatprep.subr.mxu0 %v799
      %842 = vmatpush1.msra.mxu0 %v798
      %843 = vmatprep.subr.mxu0 %v796
      %844 = vmatpush1.msra.mxu0 %v795
      %845 = vmatprep.subr.mxu0 %v793
      %846 = vmatpush1.msra.mxu0 %v792
      %847 = vmatprep.subr.mxu0 %v790
      %848 = vmatpush1.msra.mxu0 %v789
      %849 = vmatprep.subr.mxu0 %v787
      %850 = vmatpush1.msra.mxu0 %v786
      %851 = vmatprep.subr.mxu0 %v784
      %852 = vmatpush1.msra.mxu0 %v783
      %853 = vmatprep.subr.mxu0 %v781
      %854 = vmatpush1.msra.mxu0 %v780
      %855 = vmatprep.subr.mxu0 %v778
      %856 = vmatpush1.msra.mxu0 %v777
      %857 = vmatprep.subr.mxu0 0.0
      %858 = vmatpush2.msra.mxu0 0.0
      %859 = vmatprep.subr.mxu0 0.0
      %860 = vmatpush2.msra.mxu0 0.0
      %861 = vmatprep.subr.mxu0 0.0
      %862 = vmatpush2.msra.mxu0 0.0
      %863 = vmatprep.subr.mxu0 0.0
      %864 = vmatpush2.msra.mxu0 0.0
      %865 = vmatprep.subr.mxu0 0.0
      %866 = vmatpush2.msra.mxu0 0.0
      %867 = vmatprep.subr.mxu0 0.0
      %868 = vmatpush2.msra.mxu0 0.0
      %869 = vmatprep.subr.mxu0 0.0
      %870 = vmatpush2.msra.mxu0 0.0
      %871 = vmatprep.subr.mxu0 0.0
      %872 = vmatpush2.msra.mxu0 0.0
      %873 = vmatprep.subr.mxu0 0.0
      %874 = vmatpush2.msra.mxu0 0.0
      %875 = vmatprep.subr.mxu0 0.0
      %876 = vmatpush2.msra.mxu0 0.0
      %877 = vmatprep.subr.mxu0 0.0
      %878 = vmatpush2.msra.mxu0 0.0
      %879 = vmatprep.subr.mxu0 0.0
      %880 = vmatpush2.msra.mxu0 0.0
      %881 = vmatprep.subr.mxu0 0.0
      %882 = vmatpush2.msra.mxu0 0.0
      %883 = vmatprep.subr.mxu0 0.0
      %884 = vmatpush2.msra.mxu0 0.0
      %885 = vmatprep.subr.mxu0 0.0
      %886 = vmatpush2.msra.mxu0 0.0
      %887 = vmatprep.subr.mxu0 0.0
      %888 = vmatpush2.msra.mxu0 0.0
      %889 = vmatprep.mubr.f32.mxu0 0.0
      %890 = vmatmul.mubr.f32.gmra.mxu0 %v587
      %v891 = vpop.f32.mrf.mxu0
      %v892 = vadd.f32 %v356, %v891
      %v893 = vpop.f32.mrf.mxu0
      %v894 = vadd.f32 %v360, %v893
      %895 = vdwg.mxu0
      %896 = vmatprep.subr.mxu0 0.0
      %897 = vmatpush1.msra.mxu0 %v824
      %898 = vmatprep.subr.mxu0 0.0
      %899 = vmatpush1.msra.mxu0 %v821
      %900 = vmatprep.subr.mxu0 0.0
      %901 = vmatpush1.msra.mxu0 %v818
      %902 = vmatprep.subr.mxu0 0.0
      %903 = vmatpush1.msra.mxu0 %v815
      %904 = vmatprep.subr.mxu0 0.0
      %905 = vmatpush1.msra.mxu0 %v812
      %906 = vmatprep.subr.mxu0 0.0
      %907 = vmatpush1.msra.mxu0 %v809
      %908 = vmatprep.subr.mxu0 0.0
      %909 = vmatpush1.msra.mxu0 %v806
      %910 = vmatprep.subr.mxu0 0.0
      %911 = vmatpush1.msra.mxu0 %v803
      %912 = vmatprep.subr.mxu0 0.0
      %913 = vmatpush1.msra.mxu0 %v800
      %914 = vmatprep.subr.mxu0 0.0
      %915 = vmatpush1.msra.mxu0 %v797
      %916 = vmatprep.subr.mxu0 0.0
      %917 = vmatpush1.msra.mxu0 %v794
      %918 = vmatprep.subr.mxu0 0.0
      %919 = vmatpush1.msra.mxu0 %v791
      %920 = vmatprep.subr.mxu0 0.0
      %921 = vmatpush1.msra.mxu0 %v788
      %922 = vmatprep.subr.mxu0 0.0
      %923 = vmatpush1.msra.mxu0 %v785
      %924 = vmatprep.subr.mxu0 0.0
      %925 = vmatpush1.msra.mxu0 %v782
      %926 = vmatprep.subr.mxu0 0.0
      %927 = vmatpush1.msra.mxu0 %v779
      %928 = vmatprep.subr.mxu0 0.0
      %929 = vmatpush2.msra.mxu0 0.0
      %930 = vmatprep.subr.mxu0 0.0
      %931 = vmatpush2.msra.mxu0 0.0
      %932 = vmatprep.subr.mxu0 0.0
      %933 = vmatpush2.msra.mxu0 0.0
      %934 = vmatprep.subr.mxu0 0.0
      %935 = vmatpush2.msra.mxu0 0.0
      %936 = vmatprep.subr.mxu0 0.0
      %937 = vmatpush2.msra.mxu0 0.0
      %938 = vmatprep.subr.mxu0 0.0
      %939 = vmatpush2.msra.mxu0 0.0
      %940 = vmatprep.subr.mxu0 0.0
      %941 = vmatpush2.msra.mxu0 0.0
      %942 = vmatprep.subr.mxu0 0.0
      %943 = vmatpush2.msra.mxu0 0.0
      %944 = vmatprep.subr.mxu0 0.0
      %945 = vmatpush2.msra.mxu0 0.0
      %946 = vmatprep.subr.mxu0 0.0
      %947 = vmatpush2.msra.mxu0 0.0
      %948 = vmatprep.subr.mxu0 0.0
      %949 = vmatpush2.msra.mxu0 0.0
      %950 = vmatprep.subr.mxu0 0.0
      %951 = vmatpush2.msra.mxu0 0.0
      %952 = vmatprep.subr.mxu0 0.0
      %953 = vmatpush2.msra.mxu0 0.0
      %954 = vmatprep.subr.mxu0 0.0
      %955 = vmatpush2.msra.mxu0 0.0
      %956 = vmatprep.subr.mxu0 0.0
      %957 = vmatpush2.msra.mxu0 0.0
      %958 = vmatprep.subr.mxu0 0.0
      %959 = vmatpush2.msra.mxu0 0.0
      %960 = vmatprep.mubr.f32.mxu0 0.0
      %961 = vmatmul.mubr.f32.gmra.mxu0 %v587
      %v962 = vpop.f32.mrf.mxu0
      %v963 = vadd.f32 %v364, %v962
      %v964 = vpop.f32.mrf.mxu0
      %965 = vdwg.mxu0
      %v966 = vadd.f32 %v560, %v587
      %v967 = vld [vmem:[#allocation10] sm:$0xff]
      %v968 = vld [vmem:[#allocation10 + $0x8] sm:$0xff]
      %v969 = vld [vmem:[#allocation10 + $0x10] sm:$0xff]
      %v970 = vld [vmem:[#allocation10 + $0x18] sm:$0xff]
      %v971 = vld [vmem:[#allocation10 + $0x20] sm:$0xff]
      %v972 = vld [vmem:[#allocation10 + $0x28] sm:$0xff]
      %v973 = vld [vmem:[#allocation10 + $0x30] sm:$0xff]
      %v974 = vld [vmem:[#allocation10 + $0x38] sm:$0xff]
      %v975 = vld [vmem:[#allocation10 + $0x40] sm:$0xff]
      %v976 = vld [vmem:[#allocation10 + $0x48] sm:$0xff]
      %v977 = vld [vmem:[#allocation10 + $0x50] sm:$0xff]
      %v978 = vld [vmem:[#allocation10 + $0x58] sm:$0xff]
      %v979 = vld [vmem:[#allocation10 + $0x60] sm:$0xff]
      %v980 = vld [vmem:[#allocation10 + $0x68] sm:$0xff]
      %v981 = vld [vmem:[#allocation10 + $0x70] sm:$0xff]
      %v982 = vld [vmem:[#allocation10 + $0x78] sm:$0xff]
      %983 = vmatprep.subr.mxu0 0.0
      %984 = vmatpush1.msra.mxu0 %v982
      %985 = vmatprep.subr.mxu0 0.0
      %986 = vmatpush1.msra.mxu0 %v981
      %987 = vmatprep.subr.mxu0 0.0
      %988 = vmatpush1.msra.mxu0 %v980
      %989 = vmatprep.subr.mxu0 0.0
      %990 = vmatpush1.msra.mxu0 %v979
      %991 = vmatprep.subr.mxu0 0.0
      %992 = vmatpush1.msra.mxu0 %v978
      %993 = vmatprep.subr.mxu0 0.0
      %994 = vmatpush1.msra.mxu0 %v977
      %995 = vmatprep.subr.mxu0 0.0
      %996 = vmatpush1.msra.mxu0 %v976
      %997 = vmatprep.subr.mxu0 0.0
      %998 = vmatpush1.msra.mxu0 %v975
      %999 = vmatprep.subr.mxu0 0.0
      %1000 = vmatpush1.msra.mxu0 %v974
      %1001 = vmatprep.subr.mxu0 0.0
      %1002 = vmatpush1.msra.mxu0 %v973
      %1003 = vmatprep.subr.mxu0 0.0
      %1004 = vmatpush1.msra.mxu0 %v972
      %1005 = vmatprep.subr.mxu0 0.0
      %1006 = vmatpush1.msra.mxu0 %v971
      %1007 = vmatprep.subr.mxu0 0.0
      %1008 = vmatpush1.msra.mxu0 %v970
      %1009 = vmatprep.subr.mxu0 0.0
      %1010 = vmatpush1.msra.mxu0 %v969
      %1011 = vmatprep.subr.mxu0 0.0
      %1012 = vmatpush1.msra.mxu0 %v968
      %1013 = vmatprep.subr.mxu0 0.0
      %1014 = vmatpush1.msra.mxu0 %v967
      %1015 = vmatprep.subr.mxu0 0.0
      %1016 = vmatpush2.msra.mxu0 0.0
      %1017 = vmatprep.subr.mxu0 0.0
      %1018 = vmatpush2.msra.mxu0 0.0
      %1019 = vmatprep.subr.mxu0 0.0
      %1020 = vmatpush2.msra.mxu0 0.0
      %1021 = vmatprep.subr.mxu0 0.0
      %1022 = vmatpush2.msra.mxu0 0.0
      %1023 = vmatprep.subr.mxu0 0.0
      %1024 = vmatpush2.msra.mxu0 0.0
      %1025 = vmatprep.subr.mxu0 0.0
      %1026 = vmatpush2.msra.mxu0 0.0
      %1027 = vmatprep.subr.mxu0 0.0
      %1028 = vmatpush2.msra.mxu0 0.0
      %1029 = vmatprep.subr.mxu0 0.0
      %1030 = vmatpush2.msra.mxu0 0.0
      %1031 = vmatprep.subr.mxu0 0.0
      %1032 = vmatpush2.msra.mxu0 0.0
      %1033 = vmatprep.subr.mxu0 0.0
      %1034 = vmatpush2.msra.mxu0 0.0
      %1035 = vmatprep.subr.mxu0 0.0
      %1036 = vmatpush2.msra.mxu0 0.0
      %1037 = vmatprep.subr.mxu0 0.0
      %1038 = vmatpush2.msra.mxu0 0.0
      %1039 = vmatprep.subr.mxu0 0.0
      %1040 = vmatpush2.msra.mxu0 0.0
      %1041 = vmatprep.subr.mxu0 0.0
      %1042 = vmatpush2.msra.mxu0 0.0
      %1043 = vmatprep.subr.mxu0 0.0
      %1044 = vmatpush2.msra.mxu0 0.0
      %1045 = vmatprep.subr.mxu0 0.0
      %1046 = vmatpush2.msra.mxu0 0.0
      %1047 = vmatprep.mubr.f32.mxu0 0.0
      %1048 = vmatmul.mubr.f32.gmra.mxu0 %v966
      %v1049 = vpop.f32.mrf.mxu0
      %v1050 = vadd.f32 %v94, %v1049
      %v1051 = vpop.f32.mrf.mxu0
      %1052 = vdwg.mxu0
      %s1053 = scalar_lea.vmem [#allocation11], %s510
      %1054 = vst [vmem:[%s1053] sm:$0x1] %v1050
      %v1055 = vsel %vm98, -inf, %v1050
      %vm1056 = vcmask 1040384
      %v1057 = vsel %vm1056, %v1055, -inf
      %1058 = vmax.xlane.f32.xlu0 %v1057
      %v1059 = vpop.xlane.xlu0 %1058
      %vm1060 = vcmp.eq.f32.partialorder %v1055, %v1059
      %v1061 = vsel %vm1060, %v97, 128
      %v1062 = vsel %vm1056, %v1061, 2147483647
      %v1063 = vand.u32 %v1062, 65535
      %v1064 = vshra.s32 %v1062, 16
      %v1065 = vcvt.s32.f32 %v1063
      %v1066 = vcvt.s32.f32 %v1064
      %1067 = vmin.xlane.f32.xlu0 %v1066
      %v1068 = vpop.xlane.xlu0 %1067
      %vm1069 = vcmp.eq.f32.partialorder %v1066, %v1068
      %v1070 = vsel %vm1069, %v1065, inf
      %1071 = vmin.xlane.f32.xlu0 %v1070
      %v1072 = vpop.xlane.xlu0 %1071
      %v1073 = vcvt.f32.s32 %v1072
      %v1074 = vcvt.f32.s32 %v1068
      %v1075 = vshll.u32 %v1074, 16
      %v1076 = vadd.s32 %v1075, %v1073
      %s1077 = vtos %v1076
    $region54: #{tpu_custom_call.1} parent=1 // loop_footer
      %s514 = sadd.s32 1, %s510
    $region55: #{tpu_custom_call.1} parent=1 // loop_footer_branch
      %509 = sbr.rel target = $region51
    $region56: #{tpu_custom_call.1} parent=1 // loop_exit
      _
    // Predicated region
    $region57: #{tpu_custom_call.1} parent=1 // pred_check
      _
    $region58: #{tpu_custom_call.1} parent=1 // pred_check_branch
      %1079 = sbr.rel (0) target = $region60
    $region59: #{tpu_custom_call.1} parent=1 // pred_region
      %s1081 = ssub.s32 128, 128
      %1082 = vsyncadd [#allocation4], %s1081
      %s1084 = sshll.u32 [#allocation11], 4
      %s1085 = int_to_ptr.vmem [resolvable:$true] %s1084
      %1087 = dma.vmem_to_hbm [thread:$0]  %s1085, 128, %s7, [#allocation4]
    $region60: #{tpu_custom_call.1} parent=1 // pred_fallthru
      _
    // Predicated region
    $region61: #{tpu_custom_call.1} parent=1 // pred_check
      _
    $region62: #{tpu_custom_call.1} parent=1 // pred_check_branch
      %1089 = sbr.rel (0) target = $region64
    $region63: #{tpu_custom_call.1} parent=1 // pred_region
      %1090 = dma.done [#allocation4], 128
    $region64: #{tpu_custom_call.1} parent=1 // pred_fallthru
      _
    %1091 = vsyncpa [#allocation3], 1
    %1092 = vsyncpa [#allocation6], 1
    %1093 = vsyncpa [#allocation9], 1
    %1094 = vsyncpa [#allocation4], 1

</llo_original>
